<compile_context>
chip_gen: v7x
topology: tpu7x:2x2x1
jax: 0.10.0
libtpu: 0.0.40
codegen_flags: <defaults>
</compile_context>

<pallas_src>
import jax
import jax.numpy as jnp
from jax import lax
from jax.experimental import pallas as pl
from jax.experimental.pallas import tpu as pltpu


LANES = 128  # lane width of the padded logit output slab
SUBS = 8     # sublane padding of the per-sample logit slab (full (8,128) store)


# ------------------------------- kernel --------------------------------------


def fused_forward_kernel(x_ref, wenc_ref, benc_ref, w1_ref, b1_ref, w2_ref,
                         b2_ref, o_ref):
    """Fused encoder stand-in + AdaptiveAvgPool2d + flatten + classifier MLP.

    One grid step == one batch sample (grid=(B,), "parallel").

    x_ref:    (1, F, C, HW)  one sample's stacked frames, native (C, HW) layout, bf16
    wenc_ref: (FEAT, C)      1x1-conv encoder stand-in weights (transposed), bf16
    benc_ref: (FEAT, 1)      encoder bias (column), f32
    w1_ref:   (F*FEAT, HID)  classifier Linear-1 weight, bf16
    b1_ref:   (1, HID)       classifier Linear-1 bias, f32
    w2_ref:   (1, HID)       classifier Linear-2 weight (as a row), f32
    b2_ref:   (1, 1)         classifier Linear-2 bias, f32, SMEM
    o_ref:    (8, 128)       this sample's logit broadcast over the full slab
    """
    _, F, C, HW = x_ref.shape
    FEAT = wenc_ref.shape[0]

    inv_hw = 1.0 / HW
    wenc = wenc_ref[...]                                          # (FEAT, C) bf16, reused
    benc = benc_ref[...]                                          # (FEAT, 1) f32

    # ---- encoder stand-in + AdaptiveAvgPool2d, one frame at a time ----
    # h_f = ReLU(Wenc @ x_f + benc) is (FEAT, HW) f32 (lane-dense, ~8 vregs);
    # pooled_f is its lane-axis mean (XLU reduce) -> (FEAT, 1).
    pooled_cols = []
    for f in range(F):                                            # static unroll (F small)
        x_f = x_ref[0, f]                                         # (C, HW) bf16
        h_f = jnp.dot(wenc, x_f, preferred_element_type=jnp.float32)  # (FEAT, HW) f32
        h_f = jnp.maximum(h_f + benc, 0.0)
        pooled_cols.append(jnp.sum(h_f, axis=-1, keepdims=True) * inv_hw)  # (FEAT, 1)

    # features_stack for this sample: (F*FEAT, 1) — only F*FEAT floats in VMEM.
    pooled = jnp.concatenate(pooled_cols, axis=0)                 # (F*FEAT, 1) f32

    # ---- classifier Linear-1: ONE contraction over K = F*FEAT ----
    h1 = lax.dot_general(pooled.astype(jnp.bfloat16), w1_ref[...],
                         dimension_numbers=(((0,), (0,)), ((), ())),
                         preferred_element_type=jnp.float32)      # (1, HID) f32

    # nn.Dropout(0.5) is identity in eval mode (inference semantics).
    h1 = jnp.maximum(h1 + b1_ref[...], 0.0)                       # (1, HID)

    # ---- classifier Linear-2 (HID -> 1) as multiply + lane reduction ----
    logit = jnp.sum(h1 * w2_ref[...], axis=-1, keepdims=True) + b2_ref[0, 0]  # (1, 1)
    o_ref[...] = jnp.broadcast_to(logit, o_ref.shape)             # dense (8,128) store


# ------------------------------- wrapper --------------------------------------


def deepfake_detect_forward(x, params):
    """x: (B, F, C, H, W) float32 stacked frames (NCHW per frame)."""
    B, F, C, H, W = x.shape
    FEAT = params["w_enc"].shape[1]
    HID = params["w1"].shape[1]
    HW = H * W

    # Keep each frame's native (C, HW) layout so the lane axis carries HW (dense).
    # Cast to bf16 in the wrapper: halves the x HBM->VMEM DMA, kernel consumes bf16.
    xr = x.reshape(B, F, C, HW).astype(jnp.bfloat16)

    w_encT = jnp.transpose(params["w_enc"]).astype(jnp.bfloat16)   # (FEAT, C)
    b_enc = params["b_enc"].reshape(FEAT, 1).astype(jnp.float32)   # (FEAT, 1)
    w1 = params["w1"].astype(jnp.bfloat16)                         # (F*FEAT, HID)
    b1 = params["b1"].reshape(1, HID).astype(jnp.float32)          # (1, HID)
    w2 = params["w2"].reshape(1, HID).astype(jnp.float32)          # (1, HID)
    b2 = params["b2"].reshape(1, 1).astype(jnp.float32)            # (1, 1) -> SMEM

    out_pad = pl.pallas_call(
        fused_forward_kernel,
        out_shape=jax.ShapeDtypeStruct((B * SUBS, LANES), jnp.float32),
        grid=(B,),
        in_specs=[
            pl.BlockSpec((1, F, C, HW), lambda b: (b, 0, 0, 0)),   # per-sample frames
            pl.BlockSpec((FEAT, C), lambda b: (0, 0)),             # constant -> DMA once
            pl.BlockSpec((FEAT, 1), lambda b: (0, 0)),
            pl.BlockSpec((F * FEAT, HID), lambda b: (0, 0)),
            pl.BlockSpec((1, HID), lambda b: (0, 0)),
            pl.BlockSpec((1, HID), lambda b: (0, 0)),
            pl.BlockSpec(memory_space=pltpu.MemorySpace.SMEM),     # b2 scalar
        ],
        out_specs=pl.BlockSpec((SUBS, LANES), lambda b: (b, 0)),
        compiler_params=pltpu.CompilerParams(
            dimension_semantics=("parallel",)),                    # batch -> both v7x TCs
    )(xr, w_encT, b_enc, w1, b1, w2, b2)

    return out_pad[0::SUBS, 0:1]                                   # (B, 1)


# --------------------------- reference (pure JAX) ------------------------------


def reference_forward(x, params):
    """Pure-JAX reference.

    Operands are bf16-ROUNDED (matching the kernel's MXU inputs) but every dot
    runs as F32 x F32 = F32, so it executes on CPU/interpret backends too.
    bf16*bf16 products are exact in f32, so numerics match the MXU path up to
    accumulation order.
    """
    B, F, C, H, W = x.shape
    FEAT = params["w_enc"].shape[1]
    HW = H * W

    def bf16_round(a):
        return a.astype(jnp.bfloat16).astype(jnp.float32)

    xr = bf16_round(x.reshape(B, F, C, HW))
    we = bf16_round(params["w_enc"])                               # (C, FEAT)
    h = jnp.einsum("bfcp,cd->bfdp", xr, we)                        # f32 dot
    h = jnp.maximum(h + params["b_enc"].reshape(1, 1, FEAT, 1), 0.0)
    feats = jnp.mean(h, axis=-1)                                   # (B, F, FEAT)
    feats_stack = feats.reshape(B, F * FEAT)
    h1 = jnp.dot(bf16_round(feats_stack), bf16_round(params["w1"])) + params["b1"]
    h1 = jnp.maximum(h1, 0.0)                                      # Dropout(eval)=identity
    return h1 @ params["w2"] + params["b2"]


# --------------------------------- main ----------------------------------------


if __name__ == "__main__":
    # Shapes consistent with the forward: (batch, max_num_frames, C, H, W)
    B, F, C, H, W = 2, 5, 4, 16, 16
    FEAT = 32          # stand-in for encoder_flat_feature_dim
    HID = 1024         # classifier_hidden (as in the module)

    key = jax.random.PRNGKey(0)
    k_x, k_we, k_be, k_w1, k_b1, k_w2, k_b2 = jax.random.split(key, 7)

    x = jax.random.normal(k_x, (B, F, C, H, W), dtype=jnp.float32)

    params = {
        "w_enc": 0.1 * jax.random.normal(k_we, (C, FEAT), dtype=jnp.float32),
        "b_enc": 0.1 * jax.random.normal(k_be, (1, FEAT), dtype=jnp.float32),
        "w1": 0.05 * jax.random.normal(k_w1, (F * FEAT, HID), dtype=jnp.float32),
        "b1": 0.05 * jax.random.normal(k_b1, (1, HID), dtype=jnp.float32),
        "w2": 0.05 * jax.random.normal(k_w2, (HID, 1), dtype=jnp.float32),
        "b2": 0.05 * jax.random.normal(k_b2, (1, 1), dtype=jnp.float32),
    }

    out = jax.block_until_ready(deepfake_detect_forward(x, params))
    ref = jax.block_until_ready(reference_forward(x, params))

    assert out.shape == (B, 1), out.shape
    # bf16-rounded matmul operands in both kernel and reference -> modest tolerance.
    assert jnp.allclose(out, ref, rtol=2e-2, atol=3e-3), (out, ref)

    print("KERNEL_OK")
</pallas_src>

<mosaic_0001>
module attributes {stable_mosaic.version = 11 : i64} {
  func.func @fused_forward_kernel(%arg0: i32, %arg1: memref<1x5x4x256xbf16, #tpu.memory_space<vmem>>, %arg2: memref<32x4xbf16, #tpu.memory_space<vmem>>, %arg3: memref<32x1xf32, #tpu.memory_space<vmem>>, %arg4: memref<160x1024xbf16, #tpu.memory_space<vmem>>, %arg5: memref<1x1024xf32, #tpu.memory_space<vmem>>, %arg6: memref<1x1024xf32, #tpu.memory_space<vmem>>, %arg7: memref<1x1xf32, #tpu.memory_space<smem>>, %arg8: memref<8x128xf32, #tpu.memory_space<vmem>>) attributes {dimension_semantics = [#tpu.dimension_semantics<parallel>], iteration_bounds = array<i64: 2>, scalar_prefetch = 0 : i64, scratch_operands = 0 : i64, tpu.core_type = #tpu.core_type<tc>, window_params = [{transform_indices = @transform_0, window_bounds = array<i64: 1, 5, 4, 256>}, {pipeline_mode = #tpu.pipeline_mode<synchronous>, transform_indices = @transform_1, window_bounds = array<i64: 32, 4>}, {pipeline_mode = #tpu.pipeline_mode<synchronous>, transform_indices = @transform_2, window_bounds = array<i64: 32, 1>}, {pipeline_mode = #tpu.pipeline_mode<synchronous>, transform_indices = @transform_3, window_bounds = array<i64: 160, 1024>}, {pipeline_mode = #tpu.pipeline_mode<synchronous>, transform_indices = @transform_4, window_bounds = array<i64: 1, 1024>}, {pipeline_mode = #tpu.pipeline_mode<synchronous>, transform_indices = @transform_5, window_bounds = array<i64: 1, 1024>}, {transform_indices = @transform_6, window_bounds = array<i64: 1, 1>}, {transform_indices = @transform_7, window_bounds = array<i64: 8, 128>}]} {
    %c0 = arith.constant 0 : index
    %c0_0 = arith.constant 0 : index
    %0 = vector.load %arg2[%c0, %c0_0] : memref<32x4xbf16, #tpu.memory_space<vmem>>, vector<32x4xbf16>
    %c0_1 = arith.constant 0 : index
    %c0_2 = arith.constant 0 : index
    %1 = vector.load %arg3[%c0_1, %c0_2] : memref<32x1xf32, #tpu.memory_space<vmem>>, vector<32x1xf32>
    %c0_3 = arith.constant 0 : index
    %c0_4 = arith.constant 0 : index
    %c0_5 = arith.constant 0 : index
    %c0_6 = arith.constant 0 : index
    %2 = vector.load %arg1[%c0_3, %c0_4, %c0_5, %c0_6] : memref<1x5x4x256xbf16, #tpu.memory_space<vmem>>, vector<1x1x4x256xbf16>
    %3 = vector.shape_cast %2 : vector<1x1x4x256xbf16> to vector<4x256xbf16>
    %cst = arith.constant dense<0.000000e+00> : vector<32x256xf32>
    %4 = tpu.matmul %0, %3, %cst {dimension_numbers = #tpu.dot_dimension_numbers<[1], [0], [0], [1], [0, 0, 1, 1], [], []>} : vector<32x4xbf16>, vector<4x256xbf16>, vector<32x256xf32> -> vector<32x256xf32>
    %5 = vector.broadcast %1 : vector<32x1xf32> to vector<32x256xf32>
    %6 = arith.addf %4, %5 : vector<32x256xf32>
    %cst_7 = arith.constant 0.000000e+00 : f32
    %7 = vector.broadcast %cst_7 : f32 to vector<32x256xf32>
    %8 = arith.maximumf %6, %7 : vector<32x256xf32>
    %cst_8 = arith.constant dense<0.000000e+00> : vector<32xf32>
    %9 = vector.multi_reduction <add>, %8, %cst_8 [1] : vector<32x256xf32> to vector<32xf32>
    %10 = vector.shape_cast %9 : vector<32xf32> to vector<32x1xf32>
    %cst_9 = arith.constant 3.906250e-03 : f32
    %11 = vector.broadcast %cst_9 : f32 to vector<32x1xf32>
    %12 = arith.mulf %10, %11 : vector<32x1xf32>
    %c0_10 = arith.constant 0 : index
    %c1 = arith.constant 1 : index
    %c0_11 = arith.constant 0 : index
    %c0_12 = arith.constant 0 : index
    %13 = vector.load %arg1[%c0_10, %c1, %c0_11, %c0_12] : memref<1x5x4x256xbf16, #tpu.memory_space<vmem>>, vector<1x1x4x256xbf16>
    %14 = vector.shape_cast %13 : vector<1x1x4x256xbf16> to vector<4x256xbf16>
    %cst_13 = arith.constant dense<0.000000e+00> : vector<32x256xf32>
    %15 = tpu.matmul %0, %14, %cst_13 {dimension_numbers = #tpu.dot_dimension_numbers<[1], [0], [0], [1], [0, 0, 1, 1], [], []>} : vector<32x4xbf16>, vector<4x256xbf16>, vector<32x256xf32> -> vector<32x256xf32>
    %16 = vector.broadcast %1 : vector<32x1xf32> to vector<32x256xf32>
    %17 = arith.addf %15, %16 : vector<32x256xf32>
    %cst_14 = arith.constant 0.000000e+00 : f32
    %18 = vector.broadcast %cst_14 : f32 to vector<32x256xf32>
    %19 = arith.maximumf %17, %18 : vector<32x256xf32>
    %cst_15 = arith.constant dense<0.000000e+00> : vector<32xf32>
    %20 = vector.multi_reduction <add>, %19, %cst_15 [1] : vector<32x256xf32> to vector<32xf32>
    %21 = vector.shape_cast %20 : vector<32xf32> to vector<32x1xf32>
    %cst_16 = arith.constant 3.906250e-03 : f32
    %22 = vector.broadcast %cst_16 : f32 to vector<32x1xf32>
    %23 = arith.mulf %21, %22 : vector<32x1xf32>
    %c0_17 = arith.constant 0 : index
    %c2 = arith.constant 2 : index
    %c0_18 = arith.constant 0 : index
    %c0_19 = arith.constant 0 : index
    %24 = vector.load %arg1[%c0_17, %c2, %c0_18, %c0_19] : memref<1x5x4x256xbf16, #tpu.memory_space<vmem>>, vector<1x1x4x256xbf16>
    %25 = vector.shape_cast %24 : vector<1x1x4x256xbf16> to vector<4x256xbf16>
    %cst_20 = arith.constant dense<0.000000e+00> : vector<32x256xf32>
    %26 = tpu.matmul %0, %25, %cst_20 {dimension_numbers = #tpu.dot_dimension_numbers<[1], [0], [0], [1], [0, 0, 1, 1], [], []>} : vector<32x4xbf16>, vector<4x256xbf16>, vector<32x256xf32> -> vector<32x256xf32>
    %27 = vector.broadcast %1 : vector<32x1xf32> to vector<32x256xf32>
    %28 = arith.addf %26, %27 : vector<32x256xf32>
    %cst_21 = arith.constant 0.000000e+00 : f32
    %29 = vector.broadcast %cst_21 : f32 to vector<32x256xf32>
    %30 = arith.maximumf %28, %29 : vector<32x256xf32>
    %cst_22 = arith.constant dense<0.000000e+00> : vector<32xf32>
    %31 = vector.multi_reduction <add>, %30, %cst_22 [1] : vector<32x256xf32> to vector<32xf32>
    %32 = vector.shape_cast %31 : vector<32xf32> to vector<32x1xf32>
    %cst_23 = arith.constant 3.906250e-03 : f32
    %33 = vector.broadcast %cst_23 : f32 to vector<32x1xf32>
    %34 = arith.mulf %32, %33 : vector<32x1xf32>
    %c0_24 = arith.constant 0 : index
    %c3 = arith.constant 3 : index
    %c0_25 = arith.constant 0 : index
    %c0_26 = arith.constant 0 : index
    %35 = vector.load %arg1[%c0_24, %c3, %c0_25, %c0_26] : memref<1x5x4x256xbf16, #tpu.memory_space<vmem>>, vector<1x1x4x256xbf16>
    %36 = vector.shape_cast %35 : vector<1x1x4x256xbf16> to vector<4x256xbf16>
    %cst_27 = arith.constant dense<0.000000e+00> : vector<32x256xf32>
    %37 = tpu.matmul %0, %36, %cst_27 {dimension_numbers = #tpu.dot_dimension_numbers<[1], [0], [0], [1], [0, 0, 1, 1], [], []>} : vector<32x4xbf16>, vector<4x256xbf16>, vector<32x256xf32> -> vector<32x256xf32>
    %38 = vector.broadcast %1 : vector<32x1xf32> to vector<32x256xf32>
    %39 = arith.addf %37, %38 : vector<32x256xf32>
    %cst_28 = arith.constant 0.000000e+00 : f32
    %40 = vector.broadcast %cst_28 : f32 to vector<32x256xf32>
    %41 = arith.maximumf %39, %40 : vector<32x256xf32>
    %cst_29 = arith.constant dense<0.000000e+00> : vector<32xf32>
    %42 = vector.multi_reduction <add>, %41, %cst_29 [1] : vector<32x256xf32> to vector<32xf32>
    %43 = vector.shape_cast %42 : vector<32xf32> to vector<32x1xf32>
    %cst_30 = arith.constant 3.906250e-03 : f32
    %44 = vector.broadcast %cst_30 : f32 to vector<32x1xf32>
    %45 = arith.mulf %43, %44 : vector<32x1xf32>
    %c0_31 = arith.constant 0 : index
    %c4 = arith.constant 4 : index
    %c0_32 = arith.constant 0 : index
    %c0_33 = arith.constant 0 : index
    %46 = vector.load %arg1[%c0_31, %c4, %c0_32, %c0_33] : memref<1x5x4x256xbf16, #tpu.memory_space<vmem>>, vector<1x1x4x256xbf16>
    %47 = vector.shape_cast %46 : vector<1x1x4x256xbf16> to vector<4x256xbf16>
    %cst_34 = arith.constant dense<0.000000e+00> : vector<32x256xf32>
    %48 = tpu.matmul %0, %47, %cst_34 {dimension_numbers = #tpu.dot_dimension_numbers<[1], [0], [0], [1], [0, 0, 1, 1], [], []>} : vector<32x4xbf16>, vector<4x256xbf16>, vector<32x256xf32> -> vector<32x256xf32>
    %49 = vector.broadcast %1 : vector<32x1xf32> to vector<32x256xf32>
    %50 = arith.addf %48, %49 : vector<32x256xf32>
    %cst_35 = arith.constant 0.000000e+00 : f32
    %51 = vector.broadcast %cst_35 : f32 to vector<32x256xf32>
    %52 = arith.maximumf %50, %51 : vector<32x256xf32>
    %cst_36 = arith.constant dense<0.000000e+00> : vector<32xf32>
    %53 = vector.multi_reduction <add>, %52, %cst_36 [1] : vector<32x256xf32> to vector<32xf32>
    %54 = vector.shape_cast %53 : vector<32xf32> to vector<32x1xf32>
    %cst_37 = arith.constant 3.906250e-03 : f32
    %55 = vector.broadcast %cst_37 : f32 to vector<32x1xf32>
    %56 = arith.mulf %54, %55 : vector<32x1xf32>
    %57 = tpu.concatenate %12, %23, %34, %45, %56 in 0 : vector<32x1xf32>, vector<32x1xf32>, vector<32x1xf32>, vector<32x1xf32>, vector<32x1xf32> -> vector<160x1xf32>
    %58 = arith.truncf %57 : vector<160x1xf32> to vector<160x1xbf16>
    %c0_38 = arith.constant 0 : index
    %c0_39 = arith.constant 0 : index
    %59 = vector.load %arg4[%c0_38, %c0_39] : memref<160x1024xbf16, #tpu.memory_space<vmem>>, vector<160x1024xbf16>
    %cst_40 = arith.constant dense<0.000000e+00> : vector<1x1024xf32>
    %60 = tpu.matmul %58, %59, %cst_40 {dimension_numbers = #tpu.dot_dimension_numbers<[0], [0], [1], [1], [0, 1, 1, 1], [], []>} : vector<160x1xbf16>, vector<160x1024xbf16>, vector<1x1024xf32> -> vector<1x1024xf32>
    %c0_41 = arith.constant 0 : index
    %c0_42 = arith.constant 0 : index
    %61 = vector.load %arg5[%c0_41, %c0_42] : memref<1x1024xf32, #tpu.memory_space<vmem>>, vector<1x1024xf32>
    %62 = arith.addf %60, %61 : vector<1x1024xf32>
    %cst_43 = arith.constant 0.000000e+00 : f32
    %63 = vector.broadcast %cst_43 : f32 to vector<1x1024xf32>
    %64 = arith.maximumf %62, %63 : vector<1x1024xf32>
    %c0_44 = arith.constant 0 : index
    %c0_45 = arith.constant 0 : index
    %65 = vector.load %arg6[%c0_44, %c0_45] : memref<1x1024xf32, #tpu.memory_space<vmem>>, vector<1x1024xf32>
    %66 = arith.mulf %64, %65 : vector<1x1024xf32>
    %cst_46 = arith.constant dense<0.000000e+00> : vector<1xf32>
    %67 = vector.multi_reduction <add>, %66, %cst_46 [1] : vector<1x1024xf32> to vector<1xf32>
    %68 = vector.shape_cast %67 : vector<1xf32> to vector<1x1xf32>
    %c0_47 = arith.constant 0 : index
    %c0_48 = arith.constant 0 : index
    %69 = memref.load %arg7[%c0_47, %c0_48] : memref<1x1xf32, #tpu.memory_space<smem>>
    %70 = vector.broadcast %69 : f32 to vector<1x1xf32>
    %71 = arith.addf %68, %70 : vector<1x1xf32>
    %72 = vector.shape_cast %71 : vector<1x1xf32> to vector<1x1xf32>
    %73 = vector.broadcast %72 : vector<1x1xf32> to vector<8x128xf32>
    %c0_49 = arith.constant 0 : index
    %c0_50 = arith.constant 0 : index
    %74 = vector.load %arg8[%c0_49, %c0_50] : memref<8x128xf32, #tpu.memory_space<vmem>>, vector<8x128xf32>
    tpu.vector_store %arg8[%c0_49, %c0_50], %73 {strides = array<i32>} : memref<8x128xf32, #tpu.memory_space<vmem>>, vector<8x128xf32>,
    return
  }
  func.func @transform_0(%arg0: i32) -> (i32, i32, i32, i32) {
    %c0_i32 = arith.constant 0 : i32
    %c0_i32_0 = arith.constant 0 : i32
    %c0_i32_1 = arith.constant 0 : i32
    %c0_i32_2 = arith.constant 0 : i32
    return %arg0, %c0_i32, %c0_i32_0, %c0_i32_1 : i32, i32, i32, i32
  }
  func.func @transform_1(%arg0: i32) -> (i32, i32) {
    %c0_i32 = arith.constant 0 : i32
    %c0_i32_0 = arith.constant 0 : i32
    %c0_i32_1 = arith.constant 0 : i32
    return %c0_i32, %c0_i32_0 : i32, i32
  }
  func.func @transform_2(%arg0: i32) -> (i32, i32) {
    %c0_i32 = arith.constant 0 : i32
    %c0_i32_0 = arith.constant 0 : i32
    %c0_i32_1 = arith.constant 0 : i32
    return %c0_i32, %c0_i32_0 : i32, i32
  }
  func.func @transform_3(%arg0: i32) -> (i32, i32) {
    %c0_i32 = arith.constant 0 : i32
    %c0_i32_0 = arith.constant 0 : i32
    %c0_i32_1 = arith.constant 0 : i32
    return %c0_i32, %c0_i32_0 : i32, i32
  }
  func.func @transform_4(%arg0: i32) -> (i32, i32) {
    %c0_i32 = arith.constant 0 : i32
    %c0_i32_0 = arith.constant 0 : i32
    %c0_i32_1 = arith.constant 0 : i32
    return %c0_i32, %c0_i32_0 : i32, i32
  }
  func.func @transform_5(%arg0: i32) -> (i32, i32) {
    %c0_i32 = arith.constant 0 : i32
    %c0_i32_0 = arith.constant 0 : i32
    %c0_i32_1 = arith.constant 0 : i32
    return %c0_i32, %c0_i32_0 : i32, i32
  }
  func.func @transform_6(%arg0: i32) -> (i32, i32) {
    %c0_i32 = arith.constant 0 : i32
    %c0_i32_0 = arith.constant 0 : i32
    %c0_i32_1 = arith.constant 0 : i32
    return %c0_i32, %c0_i32_0 : i32, i32
  }
  func.func @transform_7(%arg0: i32) -> (i32, i32) {
    %c0_i32 = arith.constant 0 : i32
    %c0_i32_0 = arith.constant 0 : i32
    return %arg0, %c0_i32 : i32, i32
  }
}

</mosaic_0001>

<llo_original>
// kernel: tpu_custom_call.1
$region0: #{tpu_custom_call.1}
  #allocation0 [shape = 'u32[]', space=smem, size = 0x4, offset = 0x4, fixed_abs, tag = 'smem constant byte address 0x4 - core index']
  #allocation1 [shape = 'u32[144,128]{1,0:T(1,128)}', space=vmem, size = 0x12000, scoped, tag = 'internal scratch']
  #allocation2 [shape = 'f32[1,1]{1,0:T(1,128)S(6)}', space=smem, size = 0x200, scoped, tag = 'scoped memory for tpu_custom_call.1']
  %s0 = inlined_call_operand.vmem [shape: bf16[2,5,4,256], index: 0, kind: input, shape index: {}]
  %s1 = inlined_call_operand.vmem [shape: bf16[32,4], index: 1, kind: input, shape index: {}]
  %s2 = inlined_call_operand.vmem [shape: f32[32,1], index: 2, kind: input, shape index: {}]
  %s3 = inlined_call_operand.hbm [shape: bf16[160,1024], index: 3, kind: input, shape index: {}]
  %s4 = inlined_call_operand.vmem [shape: f32[1,1024], index: 4, kind: input, shape index: {}]
  %s5 = inlined_call_operand.vmem [shape: f32[1,1024], index: 5, kind: input, shape index: {}]
  %s6 = inlined_call_operand.<no memory space> [shape: f32[1,1], index: 6, kind: input, shape index: {}]
  %s7 = inlined_call_operand.hbm [shape: f32[16,128], index: 7, kind: output, shape index: {}]
  %s8 = sld [smem:[#allocation0]]
  $region65: #{tpu_custom_call.1} parent=0
    _
  %s10 = ssub.s32 1, %s8
  %s11 = scalar_select 0, %s10, %s8
  %12 = sst [smem:[#allocation2]] %s6
  $region1: #{tpu_custom_call.1} parent=0
    #allocation3 [shape = 'u8[327680]{0}', space=vmem, size = 0x50000, scoped, tag = 'input window, operand 3, single buffered']
    #allocation4 [shape = 's32[2]{0}', space=sflag, size = 0x8, scoped, tag = 'scoped memory for tpu_custom_call.1']
    #allocation5 [shape = 's32[2]{0}', space=sflag, size = 0x8, scoped, tag = 'scoped memory for tpu_custom_call.1']
    #allocation6 [shape = 'u8[8192]{0}', space=vmem, size = 0x2000, scoped, tag = 'output window, operand 0']
    %13 = vsyncpa [#allocation4], 0
    %14 = vsyncpa [#allocation5], 0
    %s15 = scalar_lea.sflag [#allocation5], 1
    %16 = vsyncpa %s15, 0
    loop: start=0, step=1, limit=4
    $region2: #{tpu_custom_call.1} parent=1 // loop_pre_header
      _
    $region3: #{tpu_custom_call.1} parent=1 // loop_header
      %s18 = sphi 0, %s22
      %p19 = scmp.ge.s32.totalorder %s18, 4
      %s28 = sphi 0, %s30
      %s31 = sphi 0, %s28
      %s32 = sphi 0, %s31
      %s48 = sphi 0, %s32
      %s52 = sphi 0, %s52
      %s54 = sphi 0, %s52
      %s55 = sphi 0, %s54
      %s69 = sphi 0, %s55
      %s73 = sphi 0, %s73
      %s75 = sphi 0, %s73
      %s76 = sphi 0, %s75
      %s90 = sphi 0, %s76
      %s94 = sphi 0, %s94
      %s96 = sphi 0, %s94
      %s97 = sphi 0, %s96
      %s111 = sphi 0, %s97
      %s115 = sphi 0, %s115
      %s117 = sphi 0, %s115
      %s118 = sphi 0, %s117
      %s132 = sphi 0, %s118
      %s136 = sphi 0, %s136
      %s138 = sphi 0, %s136
      %s139 = sphi 0, %s138
      %s153 = sphi 0, %s139
      %s157 = sphi 0, %s157
      %s159 = sphi 0, %s157
      %s160 = sphi 0, %s159
      %s174 = sphi 0, %s160
      %s180 = sphi 0, %s182
      %s183 = sphi 0, %s180
      %s184 = sphi 0, %s183
      %s200 = sphi 0, %s184
    $region4: #{tpu_custom_call.1} parent=1 // loop_header_branch
      %21 = sbr.rel (%p19) target = $region8
    $region5: #{tpu_custom_call.1} parent=1 // loop_body
      %s23 = ssub.s32 %s18, 1
      %s24 = ssub.s32 %s18, 2
      %s25 = sadd.s32 %s18, 1
      %s26 = ssub.s32 %s18, %s25
      %p27 = scmp.eq.s32.totalorder %s26, 0
      %s29 = sadd.s32 %s28, 1
      %s30 = scalar_select %p27, %s28, %s29
      %p33 = pneg %p27
      %p34 = scmp.eq.s32.totalorder %s18, 1
      %p35 = por %p33, %p34
      %p36 = scmp.ne.s32.totalorder %s28, %s31
      %p37 = scmp.eq.s32.totalorder %s18, 0
      %p38 = por %p36, %p37
      %p39 = scmp.ne.s32.totalorder %s28, %s31
      %p40 = scmp.eq.s32.totalorder %s23, 1
      %p41 = por %p39, %p40
      %p42 = scmp.ne.s32.totalorder %s31, %s32
      %p43 = scmp.eq.s32.totalorder %s23, 0
      %p44 = por %p42, %p43
      %p45 = scmp.ne.s32.totalorder %s31, %s32
      %p46 = scmp.eq.s32.totalorder %s24, 1
      %p47 = por %p45, %p46
      %p49 = scmp.ne.s32.totalorder %s32, %s48
      %p50 = scmp.eq.s32.totalorder %s24, 0
      %p51 = por %p49, %p50
      %s53 = sadd.s32 %s52, 1
      %p56 = scmp.eq.s32.totalorder %s18, 1
      %p57 = scmp.ne.s32.totalorder %s52, %s54
      %p58 = scmp.eq.s32.totalorder %s18, 0
      %p59 = por %p57, %p58
      %p60 = scmp.ne.s32.totalorder %s52, %s54
      %p61 = scmp.eq.s32.totalorder %s23, 1
      %p62 = por %p60, %p61
      %p63 = scmp.ne.s32.totalorder %s54, %s55
      %p64 = scmp.eq.s32.totalorder %s23, 0
      %p65 = por %p63, %p64
      %p66 = scmp.ne.s32.totalorder %s54, %s55
      %p67 = scmp.eq.s32.totalorder %s24, 1
      %p68 = por %p66, %p67
      %p70 = scmp.ne.s32.totalorder %s55, %s69
      %p71 = scmp.eq.s32.totalorder %s24, 0
      %p72 = por %p70, %p71
      %s74 = sadd.s32 %s73, 1
      %p77 = scmp.eq.s32.totalorder %s18, 1
      %p78 = scmp.ne.s32.totalorder %s73, %s75
      %p79 = scmp.eq.s32.totalorder %s18, 0
      %p80 = por %p78, %p79
      %p81 = scmp.ne.s32.totalorder %s73, %s75
      %p82 = scmp.eq.s32.totalorder %s23, 1
      %p83 = por %p81, %p82
      %p84 = scmp.ne.s32.totalorder %s75, %s76
      %p85 = scmp.eq.s32.totalorder %s23, 0
      %p86 = por %p84, %p85
      %p87 = scmp.ne.s32.totalorder %s75, %s76
      %p88 = scmp.eq.s32.totalorder %s24, 1
      %p89 = por %p87, %p88
      %p91 = scmp.ne.s32.totalorder %s76, %s90
      %p92 = scmp.eq.s32.totalorder %s24, 0
      %p93 = por %p91, %p92
      %s95 = sadd.s32 %s94, 1
      %p98 = scmp.eq.s32.totalorder %s18, 1
      %p99 = scmp.ne.s32.totalorder %s94, %s96
      %p100 = scmp.eq.s32.totalorder %s18, 0
      %p101 = por %p99, %p100
      %p102 = scmp.ne.s32.totalorder %s94, %s96
      %p103 = scmp.eq.s32.totalorder %s23, 1
      %p104 = por %p102, %p103
      %p105 = scmp.ne.s32.totalorder %s96, %s97
      %p106 = scmp.eq.s32.totalorder %s23, 0
      %p107 = por %p105, %p106
      %p108 = scmp.ne.s32.totalorder %s96, %s97
      %p109 = scmp.eq.s32.totalorder %s24, 1
      %p110 = por %p108, %p109
      %p112 = scmp.ne.s32.totalorder %s97, %s111
      %p113 = scmp.eq.s32.totalorder %s24, 0
      %p114 = por %p112, %p113
      %s116 = sadd.s32 %s115, 1
      %p119 = scmp.eq.s32.totalorder %s18, 1
      %p120 = scmp.ne.s32.totalorder %s115, %s117
      %p121 = scmp.eq.s32.totalorder %s18, 0
      %p122 = por %p120, %p121
      %p123 = scmp.ne.s32.totalorder %s115, %s117
      %p124 = scmp.eq.s32.totalorder %s23, 1
      %p125 = por %p123, %p124
      %p126 = scmp.ne.s32.totalorder %s117, %s118
      %p127 = scmp.eq.s32.totalorder %s23, 0
      %p128 = por %p126, %p127
      %p129 = scmp.ne.s32.totalorder %s117, %s118
      %p130 = scmp.eq.s32.totalorder %s24, 1
      %p131 = por %p129, %p130
      %p133 = scmp.ne.s32.totalorder %s118, %s132
      %p134 = scmp.eq.s32.totalorder %s24, 0
      %p135 = por %p133, %p134
      %s137 = sadd.s32 %s136, 1
      %p140 = scmp.eq.s32.totalorder %s18, 1
      %p141 = scmp.ne.s32.totalorder %s136, %s138
      %p142 = scmp.eq.s32.totalorder %s18, 0
      %p143 = por %p141, %p142
      %p144 = scmp.ne.s32.totalorder %s136, %s138
      %p145 = scmp.eq.s32.totalorder %s23, 1
      %p146 = por %p144, %p145
      %p147 = scmp.ne.s32.totalorder %s138, %s139
      %p148 = scmp.eq.s32.totalorder %s23, 0
      %p149 = por %p147, %p148
      %p150 = scmp.ne.s32.totalorder %s138, %s139
      %p151 = scmp.eq.s32.totalorder %s24, 1
      %p152 = por %p150, %p151
      %p154 = scmp.ne.s32.totalorder %s139, %s153
      %p155 = scmp.eq.s32.totalorder %s24, 0
      %p156 = por %p154, %p155
      %s158 = sadd.s32 %s157, 1
      %p161 = scmp.eq.s32.totalorder %s18, 1
      %p162 = scmp.ne.s32.totalorder %s157, %s159
      %p163 = scmp.eq.s32.totalorder %s18, 0
      %p164 = por %p162, %p163
      %p165 = scmp.ne.s32.totalorder %s157, %s159
      %p166 = scmp.eq.s32.totalorder %s23, 1
      %p167 = por %p165, %p166
      %p168 = scmp.ne.s32.totalorder %s159, %s160
      %p169 = scmp.eq.s32.totalorder %s23, 0
      %p170 = por %p168, %p169
      %p171 = scmp.ne.s32.totalorder %s159, %s160
      %p172 = scmp.eq.s32.totalorder %s24, 1
      %p173 = por %p171, %p172
      %p175 = scmp.ne.s32.totalorder %s160, %s174
      %p176 = scmp.eq.s32.totalorder %s24, 0
      %p177 = por %p175, %p176
      %s178 = ssub.s32 %s18, %s25
      %p179 = scmp.eq.s32.totalorder %s178, 0
      %s181 = sadd.s32 %s180, 1
      %s182 = scalar_select %p179, %s180, %s181
      %p185 = pneg %p179
      %p186 = scmp.eq.s32.totalorder %s18, 1
      %p187 = por %p185, %p186
      %p188 = scmp.ne.s32.totalorder %s180, %s183
      %p189 = scmp.eq.s32.totalorder %s18, 0
      %p190 = por %p188, %p189
      %p191 = scmp.ne.s32.totalorder %s180, %s183
      %p192 = scmp.eq.s32.totalorder %s23, 1
      %p193 = por %p191, %p192
      %p194 = scmp.ne.s32.totalorder %s183, %s184
      %p195 = scmp.eq.s32.totalorder %s23, 0
      %p196 = por %p194, %p195
      %p197 = scmp.ne.s32.totalorder %s183, %s184
      %p198 = scmp.eq.s32.totalorder %s24, 1
      %p199 = por %p197, %p198
      %p201 = scmp.ne.s32.totalorder %s184, %s200
      %p202 = scmp.eq.s32.totalorder %s24, 0
      %p203 = por %p201, %p202
      %p204 = scmp.le.s32.totalorder 1, %s18
      %p205 = scmp.lt.s32.totalorder %s18, 3
      %p206 = pnand %p204, %p205
      %p207 = pneg %p206
      // Predicated region
      $region9: #{tpu_custom_call.1} parent=5 // pred_check
        _
      $region10: #{tpu_custom_call.1} parent=5 // pred_check_branch
        %209 = sbr.rel (%p206) target = $region12
      $region11: #{tpu_custom_call.1} parent=5 // pred_region
        %s210 = ssub.s32 %s18, 1
        // Predicated region
        $region13: #{tpu_custom_call.1} parent=11 // pred_check
          %p211 = pneg %p65
        $region14: #{tpu_custom_call.1} parent=11 // pred_check_branch
          %213 = sbr.rel (%p211) target = $region16
        $region15: #{tpu_custom_call.1} parent=11 // pred_region
          _
        $region16: #{tpu_custom_call.1} parent=11 // pred_fallthru
          _
        // Predicated region
        $region17: #{tpu_custom_call.1} parent=11 // pred_check
          %p214 = pneg %p86
        $region18: #{tpu_custom_call.1} parent=11 // pred_check_branch
          %216 = sbr.rel (%p214) target = $region20
        $region19: #{tpu_custom_call.1} parent=11 // pred_region
          _
        $region20: #{tpu_custom_call.1} parent=11 // pred_fallthru
          _
        // Predicated region
        $region21: #{tpu_custom_call.1} parent=11 // pred_check
          %p217 = pneg %p107
        $region22: #{tpu_custom_call.1} parent=11 // pred_check_branch
          %219 = sbr.rel (%p217) target = $region24
        $region23: #{tpu_custom_call.1} parent=11 // pred_region
          %s221 = ssub.s32 10240, 10240
          %222 = vsyncadd [#allocation4], %s221
          %s223 = sshll.u32 [#allocation3], 4
          %s224 = int_to_ptr.vmem [resolvable:$true] %s223
          %229 = dma.hbm_to_vmem [thread:$0]  %s3, 10240, %s224, [#allocation4], 512, 512, 32
        $region24: #{tpu_custom_call.1} parent=11 // pred_fallthru
          _
        // Predicated region
        $region25: #{tpu_custom_call.1} parent=11 // pred_check
          %p230 = pneg %p128
        $region26: #{tpu_custom_call.1} parent=11 // pred_check_branch
          %232 = sbr.rel (%p230) target = $region28
        $region27: #{tpu_custom_call.1} parent=11 // pred_region
          _
        $region28: #{tpu_custom_call.1} parent=11 // pred_fallthru
          _
        // Predicated region
        $region29: #{tpu_custom_call.1} parent=11 // pred_check
          %p233 = pneg %p149
        $region30: #{tpu_custom_call.1} parent=11 // pred_check_branch
          %235 = sbr.rel (%p233) target = $region32
        $region31: #{tpu_custom_call.1} parent=11 // pred_region
          _
        $region32: #{tpu_custom_call.1} parent=11 // pred_fallthru
          _
        // Predicated region
        $region33: #{tpu_custom_call.1} parent=11 // pred_check
          %p236 = pneg %p170
        $region34: #{tpu_custom_call.1} parent=11 // pred_check_branch
          %238 = sbr.rel (%p236) target = $region36
        $region35: #{tpu_custom_call.1} parent=11 // pred_region
          _
        $region36: #{tpu_custom_call.1} parent=11 // pred_fallthru
          _
      $region12: #{tpu_custom_call.1} parent=5 // pred_fallthru
        _
      %p239 = scmp.lt.s32.totalorder %s18, 2
      // Predicated region
      $region37: #{tpu_custom_call.1} parent=5 // pred_check
        %p240 = pneg %p239
      $region38: #{tpu_custom_call.1} parent=5 // pred_check_branch
        %242 = sbr.rel (%p240) target = $region40
      $region39: #{tpu_custom_call.1} parent=5 // pred_region
        // Predicated region
        $region41: #{tpu_custom_call.1} parent=39 // pred_check
          %p243 = pneg %p38
        $region42: #{tpu_custom_call.1} parent=39 // pred_check_branch
          %245 = sbr.rel (%p243) target = $region44
        $region43: #{tpu_custom_call.1} parent=39 // pred_region
          %p246 = scmp.lt.s32.totalorder %s18, 1
          %s247 = scalar_select %p246, %s18, 1
          %s248 = smul.addr %s247, 10
          %s249 = smul.addr %s248, 2
          %s250 = scalar_lea.vmem %s0, %s249
        $region44: #{tpu_custom_call.1} parent=39 // pred_fallthru
          _
      $region40: #{tpu_custom_call.1} parent=5 // pred_fallthru
        _
      %p251 = scmp.le.s32.totalorder 1, %s18
      %p252 = scmp.lt.s32.totalorder %s18, 3
      %p253 = pnand %p251, %p252
      %p254 = pneg %p253
      // Predicated region
      $region45: #{tpu_custom_call.1} parent=5 // pred_check
        _
      $region46: #{tpu_custom_call.1} parent=5 // pred_check_branch
        %256 = sbr.rel (%p253) target = $region48
      $region47: #{tpu_custom_call.1} parent=5 // pred_region
        %s257 = ssub.s32 %s18, 1
        // Predicated region
        $region49: #{tpu_custom_call.1} parent=47 // pred_check
          %p258 = pneg %p107
        $region50: #{tpu_custom_call.1} parent=47 // pred_check_branch
          %260 = sbr.rel (%p258) target = $region52
        $region51: #{tpu_custom_call.1} parent=47 // pred_region
          %261 = dma.done [#allocation4], 10240
        $region52: #{tpu_custom_call.1} parent=47 // pred_fallthru
          _
        %p262 = scmp.lt.s32.totalorder %s23, 1
        %s263 = scalar_select %p262, %s23, 1
        %s264 = smul.addr %s263, 10
        %s265 = smul.addr %s264, 2
        %s266 = scalar_lea.vmem %s0, %s265
        %p267 = pneg %p44
        %p268 = pneg %p41
        %p269 = pneg %p65
        %p270 = pneg %p62
        %p271 = pneg %p86
        %p272 = pneg %p83
        %p273 = pneg %p107
        %p274 = pneg %p104
        %p275 = pneg %p128
        %p276 = pneg %p125
        %p277 = pneg %p149
        %p278 = pneg %p146
        %p279 = pneg %p170
        %p280 = pneg %p167
        %p281 = pneg %p196
        %p282 = pneg %p193
        %s283 = sand.u32 %s183, 1
        %s284 = scalar_lea.sflag [#allocation5], %s283
        %s285 = sand.u32 %s183, 1
        %s286 = smul.addr %s285, 8
        %s287 = scalar_lea.vmem [#allocation6], %s286
        %p288 = scmp.lt.s32.totalorder %s23, 1
        %s289 = scalar_select %p288, %s23, 1
        %s290 = smul.addr %s289, 10
        %s291 = smul.addr %s290, 2
        %s292 = scalar_lea.vmem %s0, %s291
        %v294 = vld [vmem:[%s1] sm:$0xf]
        %v295 = vld [vmem:[%s1 + $0x4] sm:$0xf]
        %v296 = vld [vmem:[%s1 + $0x8] sm:$0xf]
        %v297 = vld [vmem:[%s1 + $0xc] sm:$0xf]
        %v298 = vld [vmem:[%s2] sm:$0xff]
        %v299 = vld [vmem:[%s2 + $0x8] sm:$0xff]
        %v300 = vld [vmem:[%s2 + $0x10] sm:$0xff]
        %v301 = vld [vmem:[%s2 + $0x18] sm:$0xff]
        %v302 = vld [vmem:[%s292] sm:$0xf]
        %304 = vset.pattern.permute.xlu0 0
        %305 = vperm.xlu0 %304, %v298
        %v306 = vpop.permute.xlu0 %305
        %309 = vset.pattern.permute.xlu0 0
        %310 = vperm.xlu0 %309, %v299
        %v311 = vpop.permute.xlu0 %310
        %314 = vset.pattern.permute.xlu0 0
        %315 = vperm.xlu0 %314, %v300
        %v316 = vpop.permute.xlu0 %315
        %319 = vset.pattern.permute.xlu0 0
        %320 = vperm.xlu0 %319, %v301
        %v321 = vpop.permute.xlu0 %320
        %v327 = vunpack.c.l.b16 %v294
        %v328 = vunpack.c.l.b16 %v295
        %v329 = vunpack.c.l.b16 %v296
        %v330 = vunpack.c.l.b16 %v297
        %v331 = vpack.c.b16 %v328, %v327
        %v332 = vpack.c.b16 %v330, %v329
        %v335 = vunpack.c.l.s4 1983009808
        %v336 = vunpack.c.0.s8 %v335
        %v337 = vlaneseq
        %v338 = vshrl.u32 %v337, 7
        %v339 = vsub.s32 %v336, %v338
        %v340 = vrot.slane %v302, %v339
        %v341 = vcombine.high %v340, %v340
        %vm342 = vcmask 31744
        %v344 = vsel %vm342, %v331, 0
        %v347 = vsel %vm342, %v332, 0
        %vm349 = vcmask 1041408
        %v351 = vsel %vm349, %v340, 0
        %v354 = vsel %vm349, %v341, 0
        %356 = vmatprep.subr.bf16.mxu0 %v354
        %357 = vmatpush1.bf16.msra.mxu0 %v351
        %358 = vmatprep.subr.bf16.mxu0 0
        %359 = vmatpush1.bf16.msra.mxu0 0
        %360 = vmatprep.subr.bf16.mxu0 0
        %361 = vmatpush1.bf16.msra.mxu0 0
        %362 = vmatprep.subr.bf16.mxu0 0
        %363 = vmatpush1.bf16.msra.mxu0 0
        %364 = vmatprep.subr.bf16.mxu0 0
        %365 = vmatpush1.bf16.msra.mxu0 0
        %366 = vmatprep.subr.bf16.mxu0 0
        %367 = vmatpush1.bf16.msra.mxu0 0
        %368 = vmatprep.subr.bf16.mxu0 0
        %369 = vmatpush1.bf16.msra.mxu0 0
        %370 = vmatprep.subr.bf16.mxu0 0
        %371 = vmatpush1.bf16.msra.mxu0 0
        %372 = vmatprep.subr.bf16.mxu0 0
        %373 = vmatpush1.bf16.msra.mxu0 0
        %374 = vmatprep.subr.bf16.mxu0 0
        %375 = vmatpush1.bf16.msra.mxu0 0
        %376 = vmatprep.subr.bf16.mxu0 0
        %377 = vmatpush1.bf16.msra.mxu0 0
        %378 = vmatprep.subr.bf16.mxu0 0
        %379 = vmatpush1.bf16.msra.mxu0 0
        %380 = vmatprep.subr.bf16.mxu0 0
        %381 = vmatpush1.bf16.msra.mxu0 0
        %382 = vmatprep.subr.bf16.mxu0 0
        %383 = vmatpush1.bf16.msra.mxu0 0
        %384 = vmatprep.subr.bf16.mxu0 0
        %385 = vmatpush1.bf16.msra.mxu0 0
        %386 = vmatprep.subr.bf16.mxu0 0
        %387 = vmatpush1.bf16.msra.mxu0 0
        %388 = vmatprep.mubr.bf16.mxu0 0
        %389 = vmatmul.mubr.bf16.gmra.mrb[0].mxu0 %v344
        %v390 = vpop.f32.mrb[0].mxu0
        %v391 = vadd.f32 %v306, %v390
        %v392 = vpop.f32.mrb[0].mxu0
        %v393 = vadd.f32 %v306, %v392
        %v394 = vpop.f32.mrb[0].mxu0
        %v395 = vadd.f32 %v311, %v394
        %v396 = vpop.f32.mrb[0].mxu0
        %v397 = vadd.f32 %v311, %v396
        %398 = vmatprep.mubr.bf16.mxu0 0
        %399 = vmatmul.mubr.bf16.gmra.mrb[0].mxu0 %v347
        %v400 = vpop.f32.mrb[0].mxu0
        %v401 = vadd.f32 %v316, %v400
        %v402 = vpop.f32.mrb[0].mxu0
        %v403 = vadd.f32 %v316, %v402
        %v404 = vpop.f32.mrb[0].mxu0
        %v405 = vadd.f32 %v321, %v404
        %v406 = vpop.f32.mrb[0].mxu0
        %v407 = vadd.f32 %v321, %v406
        %408 = vdwg.mxu0
        %v409 = vmax.f32 %v391, 0.0
        %v410 = vmax.f32 %v393, 0.0
        %v411 = vmax.f32 %v395, 0.0
        %v412 = vmax.f32 %v397, 0.0
        %v413 = vmax.f32 %v401, 0.0
        %v414 = vmax.f32 %v403, 0.0
        %v415 = vmax.f32 %v405, 0.0
        %v416 = vmax.f32 %v407, 0.0
        %v417 = vadd.f32 %v409, %v410
        %418 = vadd.xlane.f32.xlu0 %v417
        %v419 = vpop.xlane.xlu0 %418
        %v420 = vadd.f32 %v411, %v412
        %421 = vadd.xlane.f32.xlu0 %v420
        %v422 = vpop.xlane.xlu0 %421
        %v423 = vadd.f32 %v413, %v414
        %424 = vadd.xlane.f32.xlu0 %v423
        %v425 = vpop.xlane.xlu0 %424
        %v426 = vadd.f32 %v415, %v416
        %427 = vadd.xlane.f32.xlu0 %v426
        %v428 = vpop.xlane.xlu0 %427
        %v429 = vmul.f32 %v419, 0.00390625
        %v430 = vmul.f32 %v422, 0.00390625
        %v431 = vmul.f32 %v425, 0.00390625
        %v432 = vmul.f32 %v428, 0.00390625
        %s433 = scalar_lea.vmem %s292, 4
        %v434 = vld [vmem:[%s433] sm:$0xf]
        %v437 = vunpack.c.l.s4 1983009808
        %v438 = vunpack.c.0.s8 %v437
        %v439 = vlaneseq
        %v440 = vshrl.u32 %v439, 7
        %v441 = vsub.s32 %v438, %v440
        %v442 = vrot.slane %v434, %v441
        %v443 = vcombine.high %v442, %v442
        %v445 = vsel %vm349, %v442, 0
        %v448 = vsel %vm349, %v443, 0
        %450 = vmatprep.subr.bf16.mxu0 %v448
        %451 = vmatpush1.bf16.msra.mxu0 %v445
        %452 = vmatprep.subr.bf16.mxu0 0
        %453 = vmatpush1.bf16.msra.mxu0 0
        %454 = vmatprep.subr.bf16.mxu0 0
        %455 = vmatpush1.bf16.msra.mxu0 0
        %456 = vmatprep.subr.bf16.mxu0 0
        %457 = vmatpush1.bf16.msra.mxu0 0
        %458 = vmatprep.subr.bf16.mxu0 0
        %459 = vmatpush1.bf16.msra.mxu0 0
        %460 = vmatprep.subr.bf16.mxu0 0
        %461 = vmatpush1.bf16.msra.mxu0 0
        %462 = vmatprep.subr.bf16.mxu0 0
        %463 = vmatpush1.bf16.msra.mxu0 0
        %464 = vmatprep.subr.bf16.mxu0 0
        %465 = vmatpush1.bf16.msra.mxu0 0
        %466 = vmatprep.subr.bf16.mxu0 0
        %467 = vmatpush1.bf16.msra.mxu0 0
        %468 = vmatprep.subr.bf16.mxu0 0
        %469 = vmatpush1.bf16.msra.mxu0 0
        %470 = vmatprep.subr.bf16.mxu0 0
        %471 = vmatpush1.bf16.msra.mxu0 0
        %472 = vmatprep.subr.bf16.mxu0 0
        %473 = vmatpush1.bf16.msra.mxu0 0
        %474 = vmatprep.subr.bf16.mxu0 0
        %475 = vmatpush1.bf16.msra.mxu0 0
        %476 = vmatprep.subr.bf16.mxu0 0
        %477 = vmatpush1.bf16.msra.mxu0 0
        %478 = vmatprep.subr.bf16.mxu0 0
        %479 = vmatpush1.bf16.msra.mxu0 0
        %480 = vmatprep.subr.bf16.mxu0 0
        %481 = vmatpush1.bf16.msra.mxu0 0
        %482 = vmatprep.mubr.bf16.mxu0 0
        %483 = vmatmul.mubr.bf16.gmra.mrb[0].mxu0 %v344
        %v484 = vpop.f32.mrb[0].mxu0
        %v485 = vadd.f32 %v306, %v484
        %v486 = vpop.f32.mrb[0].mxu0
        %v487 = vadd.f32 %v306, %v486
        %v488 = vpop.f32.mrb[0].mxu0
        %v489 = vadd.f32 %v311, %v488
        %v490 = vpop.f32.mrb[0].mxu0
        %v491 = vadd.f32 %v311, %v490
        %492 = vmatprep.mubr.bf16.mxu0 0
        %493 = vmatmul.mubr.bf16.gmra.mrb[0].mxu0 %v347
        %v494 = vpop.f32.mrb[0].mxu0
        %v495 = vadd.f32 %v316, %v494
        %v496 = vpop.f32.mrb[0].mxu0
        %v497 = vadd.f32 %v316, %v496
        %v498 = vpop.f32.mrb[0].mxu0
        %v499 = vadd.f32 %v321, %v498
        %v500 = vpop.f32.mrb[0].mxu0
        %v501 = vadd.f32 %v321, %v500
        %502 = vdwg.mxu0
        %v503 = vmax.f32 %v485, 0.0
        %v504 = vmax.f32 %v487, 0.0
        %v505 = vmax.f32 %v489, 0.0
        %v506 = vmax.f32 %v491, 0.0
        %v507 = vmax.f32 %v495, 0.0
        %v508 = vmax.f32 %v497, 0.0
        %v509 = vmax.f32 %v499, 0.0
        %v510 = vmax.f32 %v501, 0.0
        %v511 = vadd.f32 %v503, %v504
        %512 = vadd.xlane.f32.xlu0 %v511
        %v513 = vpop.xlane.xlu0 %512
        %v514 = vadd.f32 %v505, %v506
        %515 = vadd.xlane.f32.xlu0 %v514
        %v516 = vpop.xlane.xlu0 %515
        %v517 = vadd.f32 %v507, %v508
        %518 = vadd.xlane.f32.xlu0 %v517
        %v519 = vpop.xlane.xlu0 %518
        %v520 = vadd.f32 %v509, %v510
        %521 = vadd.xlane.f32.xlu0 %v520
        %v522 = vpop.xlane.xlu0 %521
        %v523 = vmul.f32 %v513, 0.00390625
        %v524 = vmul.f32 %v516, 0.00390625
        %v525 = vmul.f32 %v519, 0.00390625
        %v526 = vmul.f32 %v522, 0.00390625
        %s527 = scalar_lea.vmem %s292, 8
        %v528 = vld [vmem:[%s527] sm:$0xf]
        %v531 = vunpack.c.l.s4 1983009808
        %v532 = vunpack.c.0.s8 %v531
        %v533 = vlaneseq
        %v534 = vshrl.u32 %v533, 7
        %v535 = vsub.s32 %v532, %v534
        %v536 = vrot.slane %v528, %v535
        %v537 = vcombine.high %v536, %v536
        %v539 = vsel %vm349, %v536, 0
        %v542 = vsel %vm349, %v537, 0
        %544 = vmatprep.subr.bf16.mxu0 %v542
        %545 = vmatpush1.bf16.msra.mxu0 %v539
        %546 = vmatprep.subr.bf16.mxu0 0
        %547 = vmatpush1.bf16.msra.mxu0 0
        %548 = vmatprep.subr.bf16.mxu0 0
        %549 = vmatpush1.bf16.msra.mxu0 0
        %550 = vmatprep.subr.bf16.mxu0 0
        %551 = vmatpush1.bf16.msra.mxu0 0
        %552 = vmatprep.subr.bf16.mxu0 0
        %553 = vmatpush1.bf16.msra.mxu0 0
        %554 = vmatprep.subr.bf16.mxu0 0
        %555 = vmatpush1.bf16.msra.mxu0 0
        %556 = vmatprep.subr.bf16.mxu0 0
        %557 = vmatpush1.bf16.msra.mxu0 0
        %558 = vmatprep.subr.bf16.mxu0 0
        %559 = vmatpush1.bf16.msra.mxu0 0
        %560 = vmatprep.subr.bf16.mxu0 0
        %561 = vmatpush1.bf16.msra.mxu0 0
        %562 = vmatprep.subr.bf16.mxu0 0
        %563 = vmatpush1.bf16.msra.mxu0 0
        %564 = vmatprep.subr.bf16.mxu0 0
        %565 = vmatpush1.bf16.msra.mxu0 0
        %566 = vmatprep.subr.bf16.mxu0 0
        %567 = vmatpush1.bf16.msra.mxu0 0
        %568 = vmatprep.subr.bf16.mxu0 0
        %569 = vmatpush1.bf16.msra.mxu0 0
        %570 = vmatprep.subr.bf16.mxu0 0
        %571 = vmatpush1.bf16.msra.mxu0 0
        %572 = vmatprep.subr.bf16.mxu0 0
        %573 = vmatpush1.bf16.msra.mxu0 0
        %574 = vmatprep.subr.bf16.mxu0 0
        %575 = vmatpush1.bf16.msra.mxu0 0
        %576 = vmatprep.mubr.bf16.mxu0 0
        %577 = vmatmul.mubr.bf16.gmra.mrb[0].mxu0 %v344
        %v578 = vpop.f32.mrb[0].mxu0
        %v579 = vadd.f32 %v306, %v578
        %v580 = vpop.f32.mrb[0].mxu0
        %v581 = vadd.f32 %v306, %v580
        %v582 = vpop.f32.mrb[0].mxu0
        %v583 = vadd.f32 %v311, %v582
        %v584 = vpop.f32.mrb[0].mxu0
        %v585 = vadd.f32 %v311, %v584
        %586 = vmatprep.mubr.bf16.mxu0 0
        %587 = vmatmul.mubr.bf16.gmra.mrb[0].mxu0 %v347
        %v588 = vpop.f32.mrb[0].mxu0
        %v589 = vadd.f32 %v316, %v588
        %v590 = vpop.f32.mrb[0].mxu0
        %v591 = vadd.f32 %v316, %v590
        %v592 = vpop.f32.mrb[0].mxu0
        %v593 = vadd.f32 %v321, %v592
        %v594 = vpop.f32.mrb[0].mxu0
        %v595 = vadd.f32 %v321, %v594
        %596 = vdwg.mxu0
        %v597 = vmax.f32 %v579, 0.0
        %v598 = vmax.f32 %v581, 0.0
        %v599 = vmax.f32 %v583, 0.0
        %v600 = vmax.f32 %v585, 0.0
        %v601 = vmax.f32 %v589, 0.0
        %v602 = vmax.f32 %v591, 0.0
        %v603 = vmax.f32 %v593, 0.0
        %v604 = vmax.f32 %v595, 0.0
        %v605 = vadd.f32 %v597, %v598
        %606 = vadd.xlane.f32.xlu0 %v605
        %v607 = vpop.xlane.xlu0 %606
        %v608 = vadd.f32 %v599, %v600
        %609 = vadd.xlane.f32.xlu0 %v608
        %v610 = vpop.xlane.xlu0 %609
        %v611 = vadd.f32 %v601, %v602
        %612 = vadd.xlane.f32.xlu0 %v611
        %v613 = vpop.xlane.xlu0 %612
        %v614 = vadd.f32 %v603, %v604
        %615 = vadd.xlane.f32.xlu0 %v614
        %v616 = vpop.xlane.xlu0 %615
        %v617 = vmul.f32 %v607, 0.00390625
        %v618 = vmul.f32 %v610, 0.00390625
        %v619 = vmul.f32 %v613, 0.00390625
        %v620 = vmul.f32 %v616, 0.00390625
        %s621 = scalar_lea.vmem %s292, 12
        %v622 = vld [vmem:[%s621] sm:$0xf]
        %v625 = vunpack.c.l.s4 1983009808
        %v626 = vunpack.c.0.s8 %v625
        %v627 = vlaneseq
        %v628 = vshrl.u32 %v627, 7
        %v629 = vsub.s32 %v626, %v628
        %v630 = vrot.slane %v622, %v629
        %v631 = vcombine.high %v630, %v630
        %v633 = vsel %vm349, %v630, 0
        %v636 = vsel %vm349, %v631, 0
        %638 = vmatprep.subr.bf16.mxu0 %v636
        %639 = vmatpush1.bf16.msra.mxu0 %v633
        %640 = vmatprep.subr.bf16.mxu0 0
        %641 = vmatpush1.bf16.msra.mxu0 0
        %642 = vmatprep.subr.bf16.mxu0 0
        %643 = vmatpush1.bf16.msra.mxu0 0
        %644 = vmatprep.subr.bf16.mxu0 0
        %645 = vmatpush1.bf16.msra.mxu0 0
        %646 = vmatprep.subr.bf16.mxu0 0
        %647 = vmatpush1.bf16.msra.mxu0 0
        %648 = vmatprep.subr.bf16.mxu0 0
        %649 = vmatpush1.bf16.msra.mxu0 0
        %650 = vmatprep.subr.bf16.mxu0 0
        %651 = vmatpush1.bf16.msra.mxu0 0
        %652 = vmatprep.subr.bf16.mxu0 0
        %653 = vmatpush1.bf16.msra.mxu0 0
        %654 = vmatprep.subr.bf16.mxu0 0
        %655 = vmatpush1.bf16.msra.mxu0 0
        %656 = vmatprep.subr.bf16.mxu0 0
        %657 = vmatpush1.bf16.msra.mxu0 0
        %658 = vmatprep.subr.bf16.mxu0 0
        %659 = vmatpush1.bf16.msra.mxu0 0
        %660 = vmatprep.subr.bf16.mxu0 0
        %661 = vmatpush1.bf16.msra.mxu0 0
        %662 = vmatprep.subr.bf16.mxu0 0
        %663 = vmatpush1.bf16.msra.mxu0 0
        %664 = vmatprep.subr.bf16.mxu0 0
        %665 = vmatpush1.bf16.msra.mxu0 0
        %666 = vmatprep.subr.bf16.mxu0 0
        %667 = vmatpush1.bf16.msra.mxu0 0
        %668 = vmatprep.subr.bf16.mxu0 0
        %669 = vmatpush1.bf16.msra.mxu0 0
        %670 = vmatprep.mubr.bf16.mxu0 0
        %671 = vmatmul.mubr.bf16.gmra.mrb[0].mxu0 %v344
        %v672 = vpop.f32.mrb[0].mxu0
        %v673 = vadd.f32 %v306, %v672
        %v674 = vpop.f32.mrb[0].mxu0
        %v675 = vadd.f32 %v306, %v674
        %v676 = vpop.f32.mrb[0].mxu0
        %v677 = vadd.f32 %v311, %v676
        %v678 = vpop.f32.mrb[0].mxu0
        %v679 = vadd.f32 %v311, %v678
        %680 = vmatprep.mubr.bf16.mxu0 0
        %681 = vmatmul.mubr.bf16.gmra.mrb[0].mxu0 %v347
        %v682 = vpop.f32.mrb[0].mxu0
        %v683 = vadd.f32 %v316, %v682
        %v684 = vpop.f32.mrb[0].mxu0
        %v685 = vadd.f32 %v316, %v684
        %v686 = vpop.f32.mrb[0].mxu0
        %v687 = vadd.f32 %v321, %v686
        %v688 = vpop.f32.mrb[0].mxu0
        %v689 = vadd.f32 %v321, %v688
        %690 = vdwg.mxu0
        %v691 = vmax.f32 %v673, 0.0
        %v692 = vmax.f32 %v675, 0.0
        %v693 = vmax.f32 %v677, 0.0
        %v694 = vmax.f32 %v679, 0.0
        %v695 = vmax.f32 %v683, 0.0
        %v696 = vmax.f32 %v685, 0.0
        %v697 = vmax.f32 %v687, 0.0
        %v698 = vmax.f32 %v689, 0.0
        %v699 = vadd.f32 %v691, %v692
        %700 = vadd.xlane.f32.xlu0 %v699
        %v701 = vpop.xlane.xlu0 %700
        %v702 = vadd.f32 %v693, %v694
        %703 = vadd.xlane.f32.xlu0 %v702
        %v704 = vpop.xlane.xlu0 %703
        %v705 = vadd.f32 %v695, %v696
        %706 = vadd.xlane.f32.xlu0 %v705
        %v707 = vpop.xlane.xlu0 %706
        %v708 = vadd.f32 %v697, %v698
        %709 = vadd.xlane.f32.xlu0 %v708
        %v710 = vpop.xlane.xlu0 %709
        %v711 = vmul.f32 %v701, 0.00390625
        %v712 = vmul.f32 %v704, 0.00390625
        %v713 = vmul.f32 %v707, 0.00390625
        %v714 = vmul.f32 %v710, 0.00390625
        %s715 = scalar_lea.vmem %s292, 16
        %v716 = vld [vmem:[%s715] sm:$0xf]
        %v719 = vunpack.c.l.s4 1983009808
        %v720 = vunpack.c.0.s8 %v719
        %v721 = vlaneseq
        %v722 = vshrl.u32 %v721, 7
        %v723 = vsub.s32 %v720, %v722
        %v724 = vrot.slane %v716, %v723
        %v725 = vcombine.high %v724, %v724
        %v727 = vsel %vm349, %v724, 0
        %v730 = vsel %vm349, %v725, 0
        %732 = vmatprep.subr.bf16.mxu0 %v730
        %733 = vmatpush1.bf16.msra.mxu0 %v727
        %734 = vmatprep.subr.bf16.mxu0 0
        %735 = vmatpush1.bf16.msra.mxu0 0
        %736 = vmatprep.subr.bf16.mxu0 0
        %737 = vmatpush1.bf16.msra.mxu0 0
        %738 = vmatprep.subr.bf16.mxu0 0
        %739 = vmatpush1.bf16.msra.mxu0 0
        %740 = vmatprep.subr.bf16.mxu0 0
        %741 = vmatpush1.bf16.msra.mxu0 0
        %742 = vmatprep.subr.bf16.mxu0 0
        %743 = vmatpush1.bf16.msra.mxu0 0
        %744 = vmatprep.subr.bf16.mxu0 0
        %745 = vmatpush1.bf16.msra.mxu0 0
        %746 = vmatprep.subr.bf16.mxu0 0
        %747 = vmatpush1.bf16.msra.mxu0 0
        %748 = vmatprep.subr.bf16.mxu0 0
        %749 = vmatpush1.bf16.msra.mxu0 0
        %750 = vmatprep.subr.bf16.mxu0 0
        %751 = vmatpush1.bf16.msra.mxu0 0
        %752 = vmatprep.subr.bf16.mxu0 0
        %753 = vmatpush1.bf16.msra.mxu0 0
        %754 = vmatprep.subr.bf16.mxu0 0
        %755 = vmatpush1.bf16.msra.mxu0 0
        %756 = vmatprep.subr.bf16.mxu0 0
        %757 = vmatpush1.bf16.msra.mxu0 0
        %758 = vmatprep.subr.bf16.mxu0 0
        %759 = vmatpush1.bf16.msra.mxu0 0
        %760 = vmatprep.subr.bf16.mxu0 0
        %761 = vmatpush1.bf16.msra.mxu0 0
        %762 = vmatprep.subr.bf16.mxu0 0
        %763 = vmatpush1.bf16.msra.mxu0 0
        %764 = vmatprep.mubr.bf16.mxu0 0
        %765 = vmatmul.mubr.bf16.gmra.mrb[0].mxu0 %v344
        %v766 = vpop.f32.mrb[0].mxu0
        %v767 = vadd.f32 %v306, %v766
        %v768 = vpop.f32.mrb[0].mxu0
        %v769 = vadd.f32 %v306, %v768
        %v770 = vpop.f32.mrb[0].mxu0
        %v771 = vadd.f32 %v311, %v770
        %v772 = vpop.f32.mrb[0].mxu0
        %v773 = vadd.f32 %v311, %v772
        %774 = vmatprep.mubr.bf16.mxu0 0
        %775 = vmatmul.mubr.bf16.gmra.mrb[0].mxu0 %v347
        %v776 = vpop.f32.mrb[0].mxu0
        %v777 = vadd.f32 %v316, %v776
        %v778 = vpop.f32.mrb[0].mxu0
        %v779 = vadd.f32 %v316, %v778
        %v780 = vpop.f32.mrb[0].mxu0
        %v781 = vadd.f32 %v321, %v780
        %v782 = vpop.f32.mrb[0].mxu0
        %v783 = vadd.f32 %v321, %v782
        %784 = vdwg.mxu0
        %v785 = vmax.f32 %v767, 0.0
        %v786 = vmax.f32 %v769, 0.0
        %v787 = vmax.f32 %v771, 0.0
        %v788 = vmax.f32 %v773, 0.0
        %v789 = vmax.f32 %v777, 0.0
        %v790 = vmax.f32 %v779, 0.0
        %v791 = vmax.f32 %v781, 0.0
        %v792 = vmax.f32 %v783, 0.0
        %v793 = vadd.f32 %v785, %v786
        %794 = vadd.xlane.f32.xlu0 %v793
        %v795 = vpop.xlane.xlu0 %794
        %v796 = vadd.f32 %v787, %v788
        %797 = vadd.xlane.f32.xlu0 %v796
        %v798 = vpop.xlane.xlu0 %797
        %v799 = vadd.f32 %v789, %v790
        %800 = vadd.xlane.f32.xlu0 %v799
        %v801 = vpop.xlane.xlu0 %800
        %v802 = vadd.f32 %v791, %v792
        %803 = vadd.xlane.f32.xlu0 %v802
        %v804 = vpop.xlane.xlu0 %803
        %v805 = vmul.f32 %v795, 0.00390625
        %v806 = vmul.f32 %v798, 0.00390625
        %v807 = vmul.f32 %v801, 0.00390625
        %v808 = vmul.f32 %v804, 0.00390625
        %v809 = vpack.c.bf16 %v430, %v429
        %v810 = vpack.c.bf16 %v432, %v431
        %v811 = vpack.c.bf16 %v524, %v523
        %v812 = vpack.c.bf16 %v526, %v525
        %v813 = vpack.c.bf16 %v618, %v617
        %v814 = vpack.c.bf16 %v620, %v619
        %v815 = vpack.c.bf16 %v712, %v711
        %v816 = vpack.c.bf16 %v714, %v713
        %v817 = vpack.c.bf16 %v806, %v805
        %v818 = vpack.c.bf16 %v808, %v807
        %v819 = vld [vmem:[#allocation3] sm:$0xff]
        %v820 = vld [vmem:[#allocation3 + $0x8] sm:$0xff]
        %v821 = vld [vmem:[#allocation3 + $0x10] sm:$0xff]
        %v822 = vld [vmem:[#allocation3 + $0x18] sm:$0xff]
        %v823 = vld [vmem:[#allocation3 + $0x20] sm:$0xff]
        %v824 = vld [vmem:[#allocation3 + $0x28] sm:$0xff]
        %v825 = vld [vmem:[#allocation3 + $0x30] sm:$0xff]
        %v826 = vld [vmem:[#allocation3 + $0x38] sm:$0xff]
        %v827 = vld [vmem:[#allocation3 + $0x40] sm:$0xff]
        %v828 = vld [vmem:[#allocation3 + $0x48] sm:$0xff]
        %v829 = vld [vmem:[#allocation3 + $0x50] sm:$0xff]
        %v830 = vld [vmem:[#allocation3 + $0x58] sm:$0xff]
        %v831 = vld [vmem:[#allocation3 + $0x60] sm:$0xff]
        %v832 = vld [vmem:[#allocation3 + $0x68] sm:$0xff]
        %v833 = vld [vmem:[#allocation3 + $0x70] sm:$0xff]
        %v834 = vld [vmem:[#allocation3 + $0x78] sm:$0xff]
        %v835 = vld [vmem:[#allocation3 + $0x80] sm:$0xff]
        %v836 = vld [vmem:[#allocation3 + $0x88] sm:$0xff]
        %v837 = vld [vmem:[#allocation3 + $0x90] sm:$0xff]
        %v838 = vld [vmem:[#allocation3 + $0x98] sm:$0xff]
        %v839 = vld [vmem:[#allocation3 + $0xa0] sm:$0xff]
        %v840 = vld [vmem:[#allocation3 + $0xa8] sm:$0xff]
        %v841 = vld [vmem:[#allocation3 + $0xb0] sm:$0xff]
        %v842 = vld [vmem:[#allocation3 + $0xb8] sm:$0xff]
        %v843 = vld [vmem:[#allocation3 + $0xc0] sm:$0xff]
        %v844 = vld [vmem:[#allocation3 + $0xc8] sm:$0xff]
        %v845 = vld [vmem:[#allocation3 + $0xd0] sm:$0xff]
        %v846 = vld [vmem:[#allocation3 + $0xd8] sm:$0xff]
        %v847 = vld [vmem:[#allocation3 + $0xe0] sm:$0xff]
        %v848 = vld [vmem:[#allocation3 + $0xe8] sm:$0xff]
        %v849 = vld [vmem:[#allocation3 + $0xf0] sm:$0xff]
        %v850 = vld [vmem:[#allocation3 + $0xf8] sm:$0xff]
        %v851 = vld [vmem:[#allocation3 + $0x100] sm:$0xff]
        %v852 = vld [vmem:[#allocation3 + $0x108] sm:$0xff]
        %v853 = vld [vmem:[#allocation3 + $0x110] sm:$0xff]
        %v854 = vld [vmem:[#allocation3 + $0x118] sm:$0xff]
        %v855 = vld [vmem:[#allocation3 + $0x120] sm:$0xff]
        %v856 = vld [vmem:[#allocation3 + $0x128] sm:$0xff]
        %v857 = vld [vmem:[#allocation3 + $0x130] sm:$0xff]
        %v858 = vld [vmem:[#allocation3 + $0x138] sm:$0xff]
        %v859 = vld [vmem:[#allocation3 + $0x140] sm:$0xff]
        %v860 = vld [vmem:[#allocation3 + $0x148] sm:$0xff]
        %v861 = vld [vmem:[#allocation3 + $0x150] sm:$0xff]
        %v862 = vld [vmem:[#allocation3 + $0x158] sm:$0xff]
        %v863 = vld [vmem:[#allocation3 + $0x160] sm:$0xff]
        %v864 = vld [vmem:[#allocation3 + $0x168] sm:$0xff]
        %v865 = vld [vmem:[#allocation3 + $0x170] sm:$0xff]
        %v866 = vld [vmem:[#allocation3 + $0x178] sm:$0xff]
        %v867 = vld [vmem:[#allocation3 + $0x180] sm:$0xff]
        %v868 = vld [vmem:[#allocation3 + $0x188] sm:$0xff]
        %v869 = vld [vmem:[#allocation3 + $0x190] sm:$0xff]
        %v870 = vld [vmem:[#allocation3 + $0x198] sm:$0xff]
        %v871 = vld [vmem:[#allocation3 + $0x1a0] sm:$0xff]
        %v872 = vld [vmem:[#allocation3 + $0x1a8] sm:$0xff]
        %v873 = vld [vmem:[#allocation3 + $0x1b0] sm:$0xff]
        %v874 = vld [vmem:[#allocation3 + $0x1b8] sm:$0xff]
        %v875 = vld [vmem:[#allocation3 + $0x1c0] sm:$0xff]
        %v876 = vld [vmem:[#allocation3 + $0x1c8] sm:$0xff]
        %v877 = vld [vmem:[#allocation3 + $0x1d0] sm:$0xff]
        %v878 = vld [vmem:[#allocation3 + $0x1d8] sm:$0xff]
        %v879 = vld [vmem:[#allocation3 + $0x1e0] sm:$0xff]
        %v880 = vld [vmem:[#allocation3 + $0x1e8] sm:$0xff]
        %v881 = vld [vmem:[#allocation3 + $0x1f0] sm:$0xff]
        %v882 = vld [vmem:[#allocation3 + $0x1f8] sm:$0xff]
        %v883 = vld [vmem:[#allocation3 + $0x200] sm:$0xff]
        %v884 = vld [vmem:[#allocation3 + $0x208] sm:$0xff]
        %v885 = vld [vmem:[#allocation3 + $0x210] sm:$0xff]
        %v886 = vld [vmem:[#allocation3 + $0x218] sm:$0xff]
        %v887 = vld [vmem:[#allocation3 + $0x220] sm:$0xff]
        %v888 = vld [vmem:[#allocation3 + $0x228] sm:$0xff]
        %v889 = vld [vmem:[#allocation3 + $0x230] sm:$0xff]
        %v890 = vld [vmem:[#allocation3 + $0x238] sm:$0xff]
        %v891 = vld [vmem:[#allocation3 + $0x240] sm:$0xff]
        %v892 = vld [vmem:[#allocation3 + $0x248] sm:$0xff]
        %v893 = vld [vmem:[#allocation3 + $0x250] sm:$0xff]
        %v894 = vld [vmem:[#allocation3 + $0x258] sm:$0xff]
        %v895 = vld [vmem:[#allocation3 + $0x260] sm:$0xff]
        %v896 = vld [vmem:[#allocation3 + $0x268] sm:$0xff]
        %v897 = vld [vmem:[#allocation3 + $0x270] sm:$0xff]
        %v898 = vld [vmem:[#allocation3 + $0x278] sm:$0xff]
        %v899 = vld [vmem:[%s4] sm:$0xff]
        %900 = vxpose.xlu0.c.b16.start [1/8] %v809, 128
        %901 = vxpose.xlu0.c.b16.cont [2/8] %v810, 128
        %902 = vxpose.xlu0.c.b16.cont [3/8] %v811, 128
        %903 = vxpose.xlu0.c.b16.cont [4/8] %v812, 128
        %904 = vxpose.xlu0.c.b16.cont [5/8] %v813, 128
        %905 = vxpose.xlu0.c.b16.cont [6/8] %v814, 128
        %906 = vxpose.xlu0.c.b16.cont [7/8] %v815, 128
        %907 = vxpose.xlu0.c.b16.end [8/8] %v816, 128
        %v908 = vpop.trf.xlu0
        %v909 = vpop.trf.xlu0
        %v910 = vpop.trf.xlu0
        %v911 = vpop.trf.xlu0
        %v912 = vpop.trf.xlu0
        %v913 = vpop.trf.xlu0
        %v914 = vpop.trf.xlu0
        %v915 = vpop.trf.xlu0
        %916 = vxpose.xlu0.c.b16.start [1/8] %v817, 128
        %917 = vxpose.xlu0.c.b16.cont [2/8] %v818, 128
        %918 = vxpose.xlu0.c.b16.cont [3/8] 0, 128
        %919 = vxpose.xlu0.c.b16.cont [4/8] 0, 128
        %920 = vxpose.xlu0.c.b16.cont [5/8] 0, 128
        %921 = vxpose.xlu0.c.b16.cont [6/8] 0, 128
        %922 = vxpose.xlu0.c.b16.cont [7/8] 0, 128
        %923 = vxpose.xlu0.c.b16.end [8/8] 0, 128
        %v924 = vpop.trf.xlu0
        %v925 = vpop.trf.xlu0
        %v926 = vpop.trf.xlu0
        %v927 = vpop.trf.xlu0
        %v928 = vpop.trf.xlu0
        %v929 = vpop.trf.xlu0
        %v930 = vpop.trf.xlu0
        %v931 = vpop.trf.xlu0
        %v1012 = vunpack.c.l.b16 %v819
        %v1013 = vunpack.c.h.b16 %v819
        %v1014 = vunpack.c.l.b16 %v820
        %v1015 = vunpack.c.h.b16 %v820
        %v1016 = vunpack.c.l.b16 %v821
        %v1017 = vunpack.c.h.b16 %v821
        %v1018 = vunpack.c.l.b16 %v822
        %v1019 = vunpack.c.h.b16 %v822
        %v1020 = vunpack.c.l.b16 %v823
        %v1021 = vunpack.c.h.b16 %v823
        %v1022 = vunpack.c.l.b16 %v824
        %v1023 = vunpack.c.h.b16 %v824
        %v1024 = vunpack.c.l.b16 %v825
        %v1025 = vunpack.c.h.b16 %v825
        %v1026 = vunpack.c.l.b16 %v826
        %v1027 = vunpack.c.h.b16 %v826
        %v1028 = vunpack.c.l.b16 %v827
        %v1029 = vunpack.c.h.b16 %v827
        %v1030 = vunpack.c.l.b16 %v828
        %v1031 = vunpack.c.h.b16 %v828
        %v1032 = vunpack.c.l.b16 %v829
        %v1033 = vunpack.c.h.b16 %v829
        %v1034 = vunpack.c.l.b16 %v830
        %v1035 = vunpack.c.h.b16 %v830
        %v1036 = vunpack.c.l.b16 %v831
        %v1037 = vunpack.c.h.b16 %v831
        %v1038 = vunpack.c.l.b16 %v832
        %v1039 = vunpack.c.h.b16 %v832
        %v1040 = vunpack.c.l.b16 %v833
        %v1041 = vunpack.c.h.b16 %v833
        %v1042 = vunpack.c.l.b16 %v834
        %v1043 = vunpack.c.h.b16 %v834
        %v1044 = vunpack.c.l.b16 %v835
        %v1045 = vunpack.c.h.b16 %v835
        %v1046 = vunpack.c.l.b16 %v836
        %v1047 = vunpack.c.h.b16 %v836
        %v1048 = vunpack.c.l.b16 %v837
        %v1049 = vunpack.c.h.b16 %v837
        %v1050 = vunpack.c.l.b16 %v838
        %v1051 = vunpack.c.h.b16 %v838
        %v1052 = vunpack.c.l.b16 %v839
        %v1053 = vunpack.c.h.b16 %v839
        %v1054 = vunpack.c.l.b16 %v840
        %v1055 = vunpack.c.h.b16 %v840
        %v1056 = vunpack.c.l.b16 %v841
        %v1057 = vunpack.c.h.b16 %v841
        %v1058 = vunpack.c.l.b16 %v842
        %v1059 = vunpack.c.h.b16 %v842
        %v1060 = vunpack.c.l.b16 %v843
        %v1061 = vunpack.c.h.b16 %v843
        %v1062 = vunpack.c.l.b16 %v844
        %v1063 = vunpack.c.h.b16 %v844
        %v1064 = vunpack.c.l.b16 %v845
        %v1065 = vunpack.c.h.b16 %v845
        %v1066 = vunpack.c.l.b16 %v846
        %v1067 = vunpack.c.h.b16 %v846
        %v1068 = vunpack.c.l.b16 %v847
        %v1069 = vunpack.c.h.b16 %v847
        %v1070 = vunpack.c.l.b16 %v848
        %v1071 = vunpack.c.h.b16 %v848
        %v1072 = vunpack.c.l.b16 %v849
        %v1073 = vunpack.c.h.b16 %v849
        %v1074 = vunpack.c.l.b16 %v850
        %v1075 = vunpack.c.h.b16 %v850
        %v1076 = vunpack.c.l.b16 %v851
        %v1077 = vunpack.c.h.b16 %v851
        %v1078 = vunpack.c.l.b16 %v852
        %v1079 = vunpack.c.h.b16 %v852
        %v1080 = vunpack.c.l.b16 %v853
        %v1081 = vunpack.c.h.b16 %v853
        %v1082 = vunpack.c.l.b16 %v854
        %v1083 = vunpack.c.h.b16 %v854
        %v1084 = vunpack.c.l.b16 %v855
        %v1085 = vunpack.c.h.b16 %v855
        %v1086 = vunpack.c.l.b16 %v856
        %v1087 = vunpack.c.h.b16 %v856
        %v1088 = vunpack.c.l.b16 %v857
        %v1089 = vunpack.c.h.b16 %v857
        %v1090 = vunpack.c.l.b16 %v858
        %v1091 = vunpack.c.h.b16 %v858
        %v1092 = vunpack.c.l.b16 %v859
        %v1093 = vunpack.c.h.b16 %v859
        %v1094 = vunpack.c.l.b16 %v860
        %v1095 = vunpack.c.h.b16 %v860
        %v1096 = vunpack.c.l.b16 %v861
        %v1097 = vunpack.c.h.b16 %v861
        %v1098 = vunpack.c.l.b16 %v862
        %v1099 = vunpack.c.h.b16 %v862
        %v1100 = vunpack.c.l.b16 %v863
        %v1101 = vunpack.c.h.b16 %v863
        %v1102 = vunpack.c.l.b16 %v864
        %v1103 = vunpack.c.h.b16 %v864
        %v1104 = vunpack.c.l.b16 %v865
        %v1105 = vunpack.c.h.b16 %v865
        %v1106 = vunpack.c.l.b16 %v866
        %v1107 = vunpack.c.h.b16 %v866
        %v1108 = vunpack.c.l.b16 %v867
        %v1109 = vunpack.c.h.b16 %v867
        %v1110 = vunpack.c.l.b16 %v868
        %v1111 = vunpack.c.h.b16 %v868
        %v1112 = vunpack.c.l.b16 %v869
        %v1113 = vunpack.c.h.b16 %v869
        %v1114 = vunpack.c.l.b16 %v870
        %v1115 = vunpack.c.h.b16 %v870
        %v1116 = vunpack.c.l.b16 %v871
        %v1117 = vunpack.c.h.b16 %v871
        %v1118 = vunpack.c.l.b16 %v872
        %v1119 = vunpack.c.h.b16 %v872
        %v1120 = vunpack.c.l.b16 %v873
        %v1121 = vunpack.c.h.b16 %v873
        %v1122 = vunpack.c.l.b16 %v874
        %v1123 = vunpack.c.h.b16 %v874
        %v1124 = vunpack.c.l.b16 %v875
        %v1125 = vunpack.c.h.b16 %v875
        %v1126 = vunpack.c.l.b16 %v876
        %v1127 = vunpack.c.h.b16 %v876
        %v1128 = vunpack.c.l.b16 %v877
        %v1129 = vunpack.c.h.b16 %v877
        %v1130 = vunpack.c.l.b16 %v878
        %v1131 = vunpack.c.h.b16 %v878
        %v1132 = vunpack.c.l.b16 %v879
        %v1133 = vunpack.c.h.b16 %v879
        %v1134 = vunpack.c.l.b16 %v880
        %v1135 = vunpack.c.h.b16 %v880
        %v1136 = vunpack.c.l.b16 %v881
        %v1137 = vunpack.c.h.b16 %v881
        %v1138 = vunpack.c.l.b16 %v882
        %v1139 = vunpack.c.h.b16 %v882
        %v1140 = vunpack.c.l.b16 %v883
        %v1141 = vunpack.c.h.b16 %v883
        %v1142 = vunpack.c.l.b16 %v884
        %v1143 = vunpack.c.h.b16 %v884
        %v1144 = vunpack.c.l.b16 %v885
        %v1145 = vunpack.c.h.b16 %v885
        %v1146 = vunpack.c.l.b16 %v886
        %v1147 = vunpack.c.h.b16 %v886
        %v1148 = vunpack.c.l.b16 %v887
        %v1149 = vunpack.c.h.b16 %v887
        %v1150 = vunpack.c.l.b16 %v888
        %v1151 = vunpack.c.h.b16 %v888
        %v1152 = vunpack.c.l.b16 %v889
        %v1153 = vunpack.c.h.b16 %v889
        %v1154 = vunpack.c.l.b16 %v890
        %v1155 = vunpack.c.h.b16 %v890
        %v1156 = vunpack.c.l.b16 %v891
        %v1157 = vunpack.c.h.b16 %v891
        %v1158 = vunpack.c.l.b16 %v892
        %v1159 = vunpack.c.h.b16 %v892
        %v1160 = vunpack.c.l.b16 %v893
        %v1161 = vunpack.c.h.b16 %v893
        %v1162 = vunpack.c.l.b16 %v894
        %v1163 = vunpack.c.h.b16 %v894
        %v1164 = vunpack.c.l.b16 %v895
        %v1165 = vunpack.c.h.b16 %v895
        %v1166 = vunpack.c.l.b16 %v896
        %v1167 = vunpack.c.h.b16 %v896
        %v1168 = vunpack.c.l.b16 %v897
        %v1169 = vunpack.c.h.b16 %v897
        %v1170 = vunpack.c.l.b16 %v898
        %v1171 = vunpack.c.h.b16 %v898
        %v1172 = vpack.c.b16 %v1020, %v1012
        %v1173 = vpack.c.b16 %v1021, %v1013
        %v1174 = vpack.c.b16 %v1022, %v1014
        %v1175 = vpack.c.b16 %v1023, %v1015
        %v1176 = vpack.c.b16 %v1024, %v1016
        %v1177 = vpack.c.b16 %v1025, %v1017
        %v1178 = vpack.c.b16 %v1026, %v1018
        %v1179 = vpack.c.b16 %v1027, %v1019
        %v1180 = vpack.c.b16 %v1036, %v1028
        %v1181 = vpack.c.b16 %v1037, %v1029
        %v1182 = vpack.c.b16 %v1038, %v1030
        %v1183 = vpack.c.b16 %v1039, %v1031
        %v1184 = vpack.c.b16 %v1040, %v1032
        %v1185 = vpack.c.b16 %v1041, %v1033
        %v1186 = vpack.c.b16 %v1042, %v1034
        %v1187 = vpack.c.b16 %v1043, %v1035
        %v1188 = vpack.c.b16 %v1052, %v1044
        %v1189 = vpack.c.b16 %v1053, %v1045
        %v1190 = vpack.c.b16 %v1054, %v1046
        %v1191 = vpack.c.b16 %v1055, %v1047
        %v1192 = vpack.c.b16 %v1056, %v1048
        %v1193 = vpack.c.b16 %v1057, %v1049
        %v1194 = vpack.c.b16 %v1058, %v1050
        %v1195 = vpack.c.b16 %v1059, %v1051
        %v1196 = vpack.c.b16 %v1068, %v1060
        %v1197 = vpack.c.b16 %v1069, %v1061
        %v1198 = vpack.c.b16 %v1070, %v1062
        %v1199 = vpack.c.b16 %v1071, %v1063
        %v1200 = vpack.c.b16 %v1072, %v1064
        %v1201 = vpack.c.b16 %v1073, %v1065
        %v1202 = vpack.c.b16 %v1074, %v1066
        %v1203 = vpack.c.b16 %v1075, %v1067
        %v1204 = vpack.c.b16 %v1084, %v1076
        %v1205 = vpack.c.b16 %v1085, %v1077
        %v1206 = vpack.c.b16 %v1086, %v1078
        %v1207 = vpack.c.b16 %v1087, %v1079
        %v1208 = vpack.c.b16 %v1088, %v1080
        %v1209 = vpack.c.b16 %v1089, %v1081
        %v1210 = vpack.c.b16 %v1090, %v1082
        %v1211 = vpack.c.b16 %v1091, %v1083
        %v1212 = vpack.c.b16 %v1100, %v1092
        %v1213 = vpack.c.b16 %v1101, %v1093
        %v1214 = vpack.c.b16 %v1102, %v1094
        %v1215 = vpack.c.b16 %v1103, %v1095
        %v1216 = vpack.c.b16 %v1104, %v1096
        %v1217 = vpack.c.b16 %v1105, %v1097
        %v1218 = vpack.c.b16 %v1106, %v1098
        %v1219 = vpack.c.b16 %v1107, %v1099
        %v1220 = vpack.c.b16 %v1116, %v1108
        %v1221 = vpack.c.b16 %v1117, %v1109
        %v1222 = vpack.c.b16 %v1118, %v1110
        %v1223 = vpack.c.b16 %v1119, %v1111
        %v1224 = vpack.c.b16 %v1120, %v1112
        %v1225 = vpack.c.b16 %v1121, %v1113
        %v1226 = vpack.c.b16 %v1122, %v1114
        %v1227 = vpack.c.b16 %v1123, %v1115
        %v1228 = vpack.c.b16 %v1132, %v1124
        %v1229 = vpack.c.b16 %v1133, %v1125
        %v1230 = vpack.c.b16 %v1134, %v1126
        %v1231 = vpack.c.b16 %v1135, %v1127
        %v1232 = vpack.c.b16 %v1136, %v1128
        %v1233 = vpack.c.b16 %v1137, %v1129
        %v1234 = vpack.c.b16 %v1138, %v1130
        %v1235 = vpack.c.b16 %v1139, %v1131
        %v1236 = vpack.c.b16 %v1148, %v1140
        %v1237 = vpack.c.b16 %v1149, %v1141
        %v1238 = vpack.c.b16 %v1150, %v1142
        %v1239 = vpack.c.b16 %v1151, %v1143
        %v1240 = vpack.c.b16 %v1152, %v1144
        %v1241 = vpack.c.b16 %v1153, %v1145
        %v1242 = vpack.c.b16 %v1154, %v1146
        %v1243 = vpack.c.b16 %v1155, %v1147
        %v1244 = vpack.c.b16 %v1164, %v1156
        %v1245 = vpack.c.b16 %v1165, %v1157
        %v1246 = vpack.c.b16 %v1166, %v1158
        %v1247 = vpack.c.b16 %v1167, %v1159
        %v1248 = vpack.c.b16 %v1168, %v1160
        %v1249 = vpack.c.b16 %v1169, %v1161
        %v1250 = vpack.c.b16 %v1170, %v1162
        %v1251 = vpack.c.b16 %v1171, %v1163
        %v1333 = vlaneseq
        %v1334 = vshrl.u32 %v1333, 7
        %v1335 = vsub.s32 0, %v1334
        %v1336 = vrot.slane %v899, %v1335
        %v1337 = vlaneseq
        %v1338 = vshrl.u32 %v1337, 7
        %v1339 = vsub.s32 1, %v1338
        %v1340 = vrot.slane %v899, %v1339
        %v1341 = vlaneseq
        %v1342 = vshrl.u32 %v1341, 7
        %v1343 = vsub.s32 2, %v1342
        %v1344 = vrot.slane %v899, %v1343
        %v1345 = vlaneseq
        %v1346 = vshrl.u32 %v1345, 7
        %v1347 = vsub.s32 3, %v1346
        %v1348 = vrot.slane %v899, %v1347
        %v1349 = vlaneseq
        %v1350 = vshrl.u32 %v1349, 7
        %v1351 = vsub.s32 4, %v1350
        %v1352 = vrot.slane %v899, %v1351
        %v1353 = vlaneseq
        %v1354 = vshrl.u32 %v1353, 7
        %v1355 = vsub.s32 5, %v1354
        %v1356 = vrot.slane %v899, %v1355
        %v1357 = vlaneseq
        %v1358 = vshrl.u32 %v1357, 7
        %v1359 = vsub.s32 6, %v1358
        %v1360 = vrot.slane %v899, %v1359
        %v1361 = vlaneseq
        %v1362 = vshrl.u32 %v1361, 7
        %v1363 = vsub.s32 7, %v1362
        %v1364 = vrot.slane %v899, %v1363
        %vm1373 = vcmask 261120
        %v1375 = vsel %vm1373, %v924, 0
        %1377 = vmatprep.subr.bf16.mxu0 %v1173
        %1378 = vmatpush1.bf16.msra.mxu0 %v1172
        %1379 = vmatprep.subr.bf16.mxu0 %v1181
        %1380 = vmatpush1.bf16.msra.mxu0 %v1180
        %1381 = vmatprep.subr.bf16.mxu0 %v1189
        %1382 = vmatpush1.bf16.msra.mxu0 %v1188
        %1383 = vmatprep.subr.bf16.mxu0 %v1197
        %1384 = vmatpush1.bf16.msra.mxu0 %v1196
        %1385 = vmatprep.subr.bf16.mxu0 %v1205
        %1386 = vmatpush1.bf16.msra.mxu0 %v1204
        %1387 = vmatprep.subr.bf16.mxu0 %v1213
        %1388 = vmatpush1.bf16.msra.mxu0 %v1212
        %1389 = vmatprep.subr.bf16.mxu0 %v1221
        %1390 = vmatpush1.bf16.msra.mxu0 %v1220
        %1391 = vmatprep.subr.bf16.mxu0 %v1229
        %1392 = vmatpush1.bf16.msra.mxu0 %v1228
        %1393 = vmatprep.subr.bf16.mxu0 %v1237
        %1394 = vmatpush1.bf16.msra.mxu0 %v1236
        %1395 = vmatprep.subr.bf16.mxu0 %v1245
        %1396 = vmatpush1.bf16.msra.mxu0 %v1244
        %1397 = vmatprep.subr.bf16.mxu0 0
        %1398 = vmatpush1.bf16.msra.mxu0 0
        %1399 = vmatprep.subr.bf16.mxu0 0
        %1400 = vmatpush1.bf16.msra.mxu0 0
        %1401 = vmatprep.subr.bf16.mxu0 0
        %1402 = vmatpush1.bf16.msra.mxu0 0
        %1403 = vmatprep.subr.bf16.mxu0 0
        %1404 = vmatpush1.bf16.msra.mxu0 0
        %1405 = vmatprep.subr.bf16.mxu0 0
        %1406 = vmatpush1.bf16.msra.mxu0 0
        %1407 = vmatprep.subr.bf16.mxu0 0
        %1408 = vmatpush1.bf16.msra.mxu0 0
        %1409 = vmatprep.mubr.bf16.mxu0 %v1375
        %1410 = vmatmul.mubr.bf16.gmra.mrb[0].mxu0 %v908
        %v1411 = vpop.f32.mrb[0].mxu0
        %v1412 = vadd.f32 %v1336, %v1411
        %v1413 = vpop.f32.mrb[0].mxu0
        %v1414 = vadd.f32 %v1340, %v1413
        %v1415 = vpop.f32.mrb[0].mxu0
        %v1416 = vpop.f32.mrb[0].mxu0
        %1417 = vdwg.mxu0
        %1418 = vmatprep.subr.bf16.mxu0 %v1175
        %1419 = vmatpush1.bf16.msra.mxu0 %v1174
        %1420 = vmatprep.subr.bf16.mxu0 %v1183
        %1421 = vmatpush1.bf16.msra.mxu0 %v1182
        %1422 = vmatprep.subr.bf16.mxu0 %v1191
        %1423 = vmatpush1.bf16.msra.mxu0 %v1190
        %1424 = vmatprep.subr.bf16.mxu0 %v1199
        %1425 = vmatpush1.bf16.msra.mxu0 %v1198
        %1426 = vmatprep.subr.bf16.mxu0 %v1207
        %1427 = vmatpush1.bf16.msra.mxu0 %v1206
        %1428 = vmatprep.subr.bf16.mxu0 %v1215
        %1429 = vmatpush1.bf16.msra.mxu0 %v1214
        %1430 = vmatprep.subr.bf16.mxu0 %v1223
        %1431 = vmatpush1.bf16.msra.mxu0 %v1222
        %1432 = vmatprep.subr.bf16.mxu0 %v1231
        %1433 = vmatpush1.bf16.msra.mxu0 %v1230
        %1434 = vmatprep.subr.bf16.mxu0 %v1239
        %1435 = vmatpush1.bf16.msra.mxu0 %v1238
        %1436 = vmatprep.subr.bf16.mxu0 %v1247
        %1437 = vmatpush1.bf16.msra.mxu0 %v1246
        %1438 = vmatprep.subr.bf16.mxu0 0
        %1439 = vmatpush1.bf16.msra.mxu0 0
        %1440 = vmatprep.subr.bf16.mxu0 0
        %1441 = vmatpush1.bf16.msra.mxu0 0
        %1442 = vmatprep.subr.bf16.mxu0 0
        %1443 = vmatpush1.bf16.msra.mxu0 0
        %1444 = vmatprep.subr.bf16.mxu0 0
        %1445 = vmatpush1.bf16.msra.mxu0 0
        %1446 = vmatprep.subr.bf16.mxu0 0
        %1447 = vmatpush1.bf16.msra.mxu0 0
        %1448 = vmatprep.subr.bf16.mxu0 0
        %1449 = vmatpush1.bf16.msra.mxu0 0
        %1450 = vmatprep.mubr.bf16.mxu0 %v1375
        %1451 = vmatmul.mubr.bf16.gmra.mrb[0].mxu0 %v908
        %v1452 = vpop.f32.mrb[0].mxu0
        %v1453 = vadd.f32 %v1344, %v1452
        %v1454 = vpop.f32.mrb[0].mxu0
        %v1455 = vadd.f32 %v1348, %v1454
        %v1456 = vpop.f32.mrb[0].mxu0
        %v1457 = vpop.f32.mrb[0].mxu0
        %1458 = vdwg.mxu0
        %1459 = vmatprep.subr.bf16.mxu0 %v1177
        %1460 = vmatpush1.bf16.msra.mxu0 %v1176
        %1461 = vmatprep.subr.bf16.mxu0 %v1185
        %1462 = vmatpush1.bf16.msra.mxu0 %v1184
        %1463 = vmatprep.subr.bf16.mxu0 %v1193
        %1464 = vmatpush1.bf16.msra.mxu0 %v1192
        %1465 = vmatprep.subr.bf16.mxu0 %v1201
        %1466 = vmatpush1.bf16.msra.mxu0 %v1200
        %1467 = vmatprep.subr.bf16.mxu0 %v1209
        %1468 = vmatpush1.bf16.msra.mxu0 %v1208
        %1469 = vmatprep.subr.bf16.mxu0 %v1217
        %1470 = vmatpush1.bf16.msra.mxu0 %v1216
        %1471 = vmatprep.subr.bf16.mxu0 %v1225
        %1472 = vmatpush1.bf16.msra.mxu0 %v1224
        %1473 = vmatprep.subr.bf16.mxu0 %v1233
        %1474 = vmatpush1.bf16.msra.mxu0 %v1232
        %1475 = vmatprep.subr.bf16.mxu0 %v1241
        %1476 = vmatpush1.bf16.msra.mxu0 %v1240
        %1477 = vmatprep.subr.bf16.mxu0 %v1249
        %1478 = vmatpush1.bf16.msra.mxu0 %v1248
        %1479 = vmatprep.subr.bf16.mxu0 0
        %1480 = vmatpush1.bf16.msra.mxu0 0
        %1481 = vmatprep.subr.bf16.mxu0 0
        %1482 = vmatpush1.bf16.msra.mxu0 0
        %1483 = vmatprep.subr.bf16.mxu0 0
        %1484 = vmatpush1.bf16.msra.mxu0 0
        %1485 = vmatprep.subr.bf16.mxu0 0
        %1486 = vmatpush1.bf16.msra.mxu0 0
        %1487 = vmatprep.subr.bf16.mxu0 0
        %1488 = vmatpush1.bf16.msra.mxu0 0
        %1489 = vmatprep.subr.bf16.mxu0 0
        %1490 = vmatpush1.bf16.msra.mxu0 0
        %1491 = vmatprep.mubr.bf16.mxu0 %v1375
        %1492 = vmatmul.mubr.bf16.gmra.mrb[0].mxu0 %v908
        %v1493 = vpop.f32.mrb[0].mxu0
        %v1494 = vadd.f32 %v1352, %v1493
        %v1495 = vpop.f32.mrb[0].mxu0
        %v1496 = vadd.f32 %v1356, %v1495
        %v1497 = vpop.f32.mrb[0].mxu0
        %v1498 = vpop.f32.mrb[0].mxu0
        %1499 = vdwg.mxu0
        %1500 = vmatprep.subr.bf16.mxu0 %v1179
        %1501 = vmatpush1.bf16.msra.mxu0 %v1178
        %1502 = vmatprep.subr.bf16.mxu0 %v1187
        %1503 = vmatpush1.bf16.msra.mxu0 %v1186
        %1504 = vmatprep.subr.bf16.mxu0 %v1195
        %1505 = vmatpush1.bf16.msra.mxu0 %v1194
        %1506 = vmatprep.subr.bf16.mxu0 %v1203
        %1507 = vmatpush1.bf16.msra.mxu0 %v1202
        %1508 = vmatprep.subr.bf16.mxu0 %v1211
        %1509 = vmatpush1.bf16.msra.mxu0 %v1210
        %1510 = vmatprep.subr.bf16.mxu0 %v1219
        %1511 = vmatpush1.bf16.msra.mxu0 %v1218
        %1512 = vmatprep.subr.bf16.mxu0 %v1227
        %1513 = vmatpush1.bf16.msra.mxu0 %v1226
        %1514 = vmatprep.subr.bf16.mxu0 %v1235
        %1515 = vmatpush1.bf16.msra.mxu0 %v1234
        %1516 = vmatprep.subr.bf16.mxu0 %v1243
        %1517 = vmatpush1.bf16.msra.mxu0 %v1242
        %1518 = vmatprep.subr.bf16.mxu0 %v1251
        %1519 = vmatpush1.bf16.msra.mxu0 %v1250
        %1520 = vmatprep.subr.bf16.mxu0 0
        %1521 = vmatpush1.bf16.msra.mxu0 0
        %1522 = vmatprep.subr.bf16.mxu0 0
        %1523 = vmatpush1.bf16.msra.mxu0 0
        %1524 = vmatprep.subr.bf16.mxu0 0
        %1525 = vmatpush1.bf16.msra.mxu0 0
        %1526 = vmatprep.subr.bf16.mxu0 0
        %1527 = vmatpush1.bf16.msra.mxu0 0
        %1528 = vmatprep.subr.bf16.mxu0 0
        %1529 = vmatpush1.bf16.msra.mxu0 0
        %1530 = vmatprep.subr.bf16.mxu0 0
        %1531 = vmatpush1.bf16.msra.mxu0 0
        %1532 = vmatprep.mubr.bf16.mxu0 %v1375
        %1533 = vmatmul.mubr.bf16.gmra.mrb[0].mxu0 %v908
        %v1534 = vpop.f32.mrb[0].mxu0
        %v1535 = vadd.f32 %v1360, %v1534
        %v1536 = vpop.f32.mrb[0].mxu0
        %v1537 = vadd.f32 %v1364, %v1536
        %v1538 = vpop.f32.mrb[0].mxu0
        %v1539 = vpop.f32.mrb[0].mxu0
        %1540 = vdwg.mxu0
        %v1541 = vmax.f32 %v1412, 0.0
        %v1542 = vmax.f32 %v1414, 0.0
        %v1543 = vmax.f32 %v1453, 0.0
        %v1544 = vmax.f32 %v1455, 0.0
        %v1545 = vmax.f32 %v1494, 0.0
        %v1546 = vmax.f32 %v1496, 0.0
        %v1547 = vmax.f32 %v1535, 0.0
        %v1548 = vmax.f32 %v1537, 0.0
        %v1549 = vld [vmem:[%s5] sm:$0xff]
        %v1551 = vlaneseq
        %v1552 = vshrl.u32 %v1551, 7
        %v1553 = vsub.s32 0, %v1552
        %v1554 = vrot.slane %v1549, %v1553
        %v1555 = vlaneseq
        %v1556 = vshrl.u32 %v1555, 7
        %v1557 = vsub.s32 1, %v1556
        %v1558 = vrot.slane %v1549, %v1557
        %v1559 = vlaneseq
        %v1560 = vshrl.u32 %v1559, 7
        %v1561 = vsub.s32 2, %v1560
        %v1562 = vrot.slane %v1549, %v1561
        %v1563 = vlaneseq
        %v1564 = vshrl.u32 %v1563, 7
        %v1565 = vsub.s32 3, %v1564
        %v1566 = vrot.slane %v1549, %v1565
        %v1567 = vlaneseq
        %v1568 = vshrl.u32 %v1567, 7
        %v1569 = vsub.s32 4, %v1568
        %v1570 = vrot.slane %v1549, %v1569
        %v1571 = vlaneseq
        %v1572 = vshrl.u32 %v1571, 7
        %v1573 = vsub.s32 5, %v1572
        %v1574 = vrot.slane %v1549, %v1573
        %v1575 = vlaneseq
        %v1576 = vshrl.u32 %v1575, 7
        %v1577 = vsub.s32 6, %v1576
        %v1578 = vrot.slane %v1549, %v1577
        %v1579 = vlaneseq
        %v1580 = vshrl.u32 %v1579, 7
        %v1581 = vsub.s32 7, %v1580
        %v1582 = vrot.slane %v1549, %v1581
        %v1591 = vmul.f32 %v1541, %v1554
        %v1592 = vmul.f32 %v1542, %v1558
        %v1593 = vmul.f32 %v1543, %v1562
        %v1594 = vmul.f32 %v1544, %v1566
        %v1595 = vmul.f32 %v1545, %v1570
        %v1596 = vmul.f32 %v1546, %v1574
        %v1597 = vmul.f32 %v1547, %v1578
        %v1598 = vmul.f32 %v1548, %v1582
        %vm1599 = vcmask 1040384
        %v1600 = vsel %vm1599, %v1591, 0.0
        %v1601 = vsel %vm1599, %v1592, 0.0
        %v1602 = vadd.f32 %v1600, %v1601
        %v1603 = vsel %vm1599, %v1593, 0.0
        %v1604 = vadd.f32 %v1602, %v1603
        %v1605 = vsel %vm1599, %v1594, 0.0
        %v1606 = vadd.f32 %v1604, %v1605
        %v1607 = vsel %vm1599, %v1595, 0.0
        %v1608 = vadd.f32 %v1606, %v1607
        %v1609 = vsel %vm1599, %v1596, 0.0
        %v1610 = vadd.f32 %v1608, %v1609
        %v1611 = vsel %vm1599, %v1597, 0.0
        %v1612 = vadd.f32 %v1610, %v1611
        %v1613 = vsel %vm1599, %v1598, 0.0
        %v1614 = vadd.f32 %v1612, %v1613
        %1615 = vadd.xlane.f32.xlu0 %v1614
        %v1616 = vpop.xlane.xlu0 %1615
        %s1617 = sld [smem:[#allocation2]]
        %v1618 = vstv %s1617
        %v1619 = vadd.f32 %v1616, %v1618
        %v1620 = vlaneseq
        %v1621 = vshrl.u32 %v1620, 7
        %v1622 = vsub.s32 0, %v1621
        %v1623 = vrot.slane %v1619, %v1622
        %1624 = vst [vmem:[%s287] sm:$0xff] %v1623
        %s1625 = sand.u32 %s183, 1
        %s1626 = scalar_lea.sflag [#allocation5], %s1625
        %s1627 = sand.u32 %s183, 1
        %s1628 = smul.addr %s1627, 8
        %s1629 = scalar_lea.vmem [#allocation6], %s1628
        // Predicated region
        $region53: #{tpu_custom_call.1} parent=47 // pred_check
          %p1630 = pneg %p193
        $region54: #{tpu_custom_call.1} parent=47 // pred_check_branch
          %1632 = sbr.rel (%p1630) target = $region56
        $region55: #{tpu_custom_call.1} parent=47 // pred_region
          %s1634 = ssub.s32 128, 128
          %1635 = vsyncadd %s1626, %s1634
          %s1636 = smul.addr %s23, 128
          %s1637 = scalar_lea.hbm %s7, %s1636
          %s1639 = sshll.u32 %s1629, 4
          %s1640 = int_to_ptr.vmem [resolvable:$true] %s1639
          %1642 = dma.vmem_to_hbm [thread:$0]  %s1640, 128, %s1637, %s1626
        $region56: #{tpu_custom_call.1} parent=47 // pred_fallthru
          _
      $region48: #{tpu_custom_call.1} parent=5 // pred_fallthru
        _
      %p1643 = scmp.le.s32.totalorder 2, %s18
      // Predicated region
      $region57: #{tpu_custom_call.1} parent=5 // pred_check
        %p1644 = pneg %p1643
      $region58: #{tpu_custom_call.1} parent=5 // pred_check_branch
        %1646 = sbr.rel (%p1644) target = $region60
      $region59: #{tpu_custom_call.1} parent=5 // pred_region
        %s1647 = ssub.s32 %s18, 2
        // Predicated region
        $region61: #{tpu_custom_call.1} parent=59 // pred_check
          %p1648 = pneg %p199
        $region62: #{tpu_custom_call.1} parent=59 // pred_check_branch
          %1650 = sbr.rel (%p1648) target = $region64
        $region63: #{tpu_custom_call.1} parent=59 // pred_region
          %s1651 = sand.u32 %s184, 1
          %s1652 = scalar_lea.sflag [#allocation5], %s1651
          %s1653 = sand.u32 %s184, 1
          %s1654 = smul.addr %s1653, 8
          %s1655 = scalar_lea.vmem [#allocation6], %s1654
          %1656 = dma.done %s1652, 128
        $region64: #{tpu_custom_call.1} parent=59 // pred_fallthru
          _
      $region60: #{tpu_custom_call.1} parent=5 // pred_fallthru
        _
    $region6: #{tpu_custom_call.1} parent=1 // loop_footer
      %s22 = sadd.s32 1, %s18
    $region7: #{tpu_custom_call.1} parent=1 // loop_footer_branch
      %17 = sbr.rel target = $region3
    $region8: #{tpu_custom_call.1} parent=1 // loop_exit
      _
    %1657 = vsyncpa [#allocation4], 1
    %s1658 = scalar_lea.sflag [#allocation4], 1
    %1659 = vsyncpa %s1658, 1
    %1660 = vsyncpa [#allocation5], 1
    %s1661 = scalar_lea.sflag [#allocation5], 1
    %1662 = vsyncpa %s1661, 1

</llo_original>
